<compile_context>
chip_gen: v7x
topology: tpu7x:2x2x1
jax: 0.10.0
libtpu: 0.0.40
codegen_flags: <defaults>
</compile_context>

<pallas_src>
import functools
import math

import numpy as np
import jax
import jax.numpy as jnp
from jax import lax
from jax.experimental import pallas as pl
from jax.experimental.pallas import tpu as pltpu


# ----------------------------------------------------------------------------
# Stage 1: per-head K (projection + rotary) and V (projection) precompute.
# grid = (batch, kv_tile, head)
# ----------------------------------------------------------------------------
def _kv_proj_kernel(k_ref, v_ref, wk_ref, bk_ref, wv_ref, bv_ref,
                    cos_ref, sin_ref, ko_ref, vo_ref):
    f32 = jnp.float32
    hd = wk_ref.shape[1]
    half = hd // 2

    # bf16 MXU operands, f32 accumulation; weights pre-transposed to (in, out).
    k_h = jnp.dot(k_ref[0], wk_ref[...], preferred_element_type=f32) + bk_ref[...]
    # Half-split rotary: rotate_half == swap the two lane halves; the sign is
    # folded into the sin table on the host.
    k_sw = jnp.concatenate([k_h[:, half:], k_h[:, :half]], axis=-1)
    k_h = k_h * cos_ref[...] + k_sw * sin_ref[...]

    v_h = jnp.dot(v_ref[0], wv_ref[...], preferred_element_type=f32) + bv_ref[...]

    ko_ref[0, 0] = k_h.astype(ko_ref.dtype)
    vo_ref[0, 0] = v_h.astype(vo_ref.dtype)


# ----------------------------------------------------------------------------
# Stage 2: flash-style attention + per-head output projection accumulation.
# grid = (batch, q_tile, head, kv_tile)
# ----------------------------------------------------------------------------
def _mha_attn_kernel(q_ref, k_ref, v_ref, wq_ref, bq_ref, wo_ref, bo_ref,
                     cos_ref, sin_ref, o_ref,
                     q_sc, m_sc, l_sc, acc_sc, oacc_sc, *, causal, scale):
    qt = pl.program_id(1)
    h = pl.program_id(2)
    kt = pl.program_id(3)
    n_h = pl.num_programs(2)
    n_kv = pl.num_programs(3)

    tq = q_ref.shape[1]
    tk = k_ref.shape[2]
    hd = wq_ref.shape[1]
    half = hd // 2
    f32 = jnp.float32
    bf16 = jnp.bfloat16

    # Zero the per-(batch, q-tile) output accumulator at the very first step.
    @pl.when(jnp.logical_and(h == 0, kt == 0))
    def _init_out():
        oacc_sc[...] = jnp.zeros_like(oacc_sc)

    # Q projection + rotary + folded 1/sqrt(hd) scale: once per (b, qt, head),
    # cached in bf16 scratch for the whole KV sweep.
    @pl.when(kt == 0)
    def _init_head():
        q_h = jnp.dot(q_ref[0], wq_ref[...], preferred_element_type=f32) + bq_ref[...]
        q_sw = jnp.concatenate([q_h[:, half:], q_h[:, :half]], axis=-1)
        q_h = (q_h * cos_ref[...] + q_sw * sin_ref[...]) * scale
        q_sc[...] = q_h.astype(bf16)
        m_sc[...] = jnp.full_like(m_sc, -jnp.inf)
        l_sc[...] = jnp.zeros_like(l_sc)
        acc_sc[...] = jnp.zeros_like(acc_sc)

    def _update():
        # (tq, hd) x (tk, hd) contracted on hd -> (tq, tk) scores in f32.
        s = lax.dot_general(q_sc[...], k_ref[0, 0],
                            (((1,), (1,)), ((), ())),
                            preferred_element_type=f32)
        if causal:
            row = qt * tq + lax.broadcasted_iota(jnp.int32, (tq, tk), 0)
            col = kt * tk + lax.broadcasted_iota(jnp.int32, (tq, tk), 1)
            s = jnp.where(col <= row, s, -jnp.inf)
        m_prev = m_sc[...]
        m_new = jnp.maximum(m_prev, jnp.max(s, axis=-1, keepdims=True))
        alpha = jnp.exp(m_prev - m_new)
        p = jnp.exp(s - m_new)
        l_sc[...] = alpha * l_sc[...] + jnp.sum(p, axis=-1, keepdims=True)
        acc_sc[...] = alpha * acc_sc[...] + jnp.dot(
            p.astype(bf16), v_ref[0, 0], preferred_element_type=f32)
        m_sc[...] = m_new

    if causal:
        # Skip KV tiles that lie entirely above the diagonal for this q tile
        # (~2x fewer score/PV FLOPs).  Finalize below still runs.
        pl.when(kt * tk <= qt * tq + tq - 1)(_update)
    else:
        _update()

    @pl.when(kt == n_kv - 1)
    def _finalize():
        # Normalize AFTER the PV matmul: (tq, hd) multiplies instead of (tq, L).
        attn = acc_sc[...] * (1.0 / l_sc[...])
        contrib = jnp.dot(attn.astype(bf16), wo_ref[...],
                          preferred_element_type=f32)          # (tq, D)
        oacc_sc[...] = oacc_sc[...] + contrib

    @pl.when(jnp.logical_and(h == n_h - 1, kt == n_kv - 1))
    def _write():
        # Single lane-dense bf16 store per (batch, q-tile).
        o_ref[0] = (oacc_sc[...] + bo_ref[...]).astype(o_ref.dtype)


# ----------------------------------------------------------------------------
# Wrapper: host-side layout prep (transpose / permute / bf16) + two pallas_calls.
# ----------------------------------------------------------------------------
def mha_pallas(q, k, v, params, cos, sin, *, num_heads, causal=False,
               block_q=256, block_k=256):
    B, L, D = q.shape
    H = num_heads
    hd = D // H
    assert H * hd == D
    # Lane-dense head blocks: head_dim must fill the 128-lane tile.
    assert hd % 128 == 0, "this kernel expects head_dim to be a multiple of 128"
    block_q = min(block_q, L)   # 128 on v5e, 256 on v6e/v7x for real shapes
    block_k = min(block_k, L)
    assert L % block_q == 0 and block_q % 8 == 0
    assert L % block_k == 0 and block_k % 8 == 0

    wq, bq, wk, bk, wv, bv, wo, bo = params

    # interleaved-pair -> half-split permutation (within each head).
    perm_head = np.concatenate([np.arange(0, hd, 2), np.arange(1, hd, 2)])
    perm = np.concatenate([hh * hd + perm_head for hh in range(H)])

    # Pre-transpose weights to (in, out); permute Q/K output columns; bf16.
    wqT = wq.T[:, perm].astype(jnp.bfloat16)
    wkT = wk.T[:, perm].astype(jnp.bfloat16)
    wvT = wv.T.astype(jnp.bfloat16)
    woT = wo.T.astype(jnp.bfloat16)
    bq_p = bq[perm].reshape(1, D).astype(jnp.float32)
    bk_p = bk[perm].reshape(1, D).astype(jnp.float32)
    bv_p = bv.reshape(1, D).astype(jnp.float32)
    bo_p = bo.reshape(1, D).astype(jnp.float32)

    # Rotary tables in half-split layout; rotate_half sign folded into sin.
    sign = np.concatenate([-np.ones(hd // 2, np.float32),
                           np.ones(hd // 2, np.float32)])
    cos_hs = cos[:, perm_head].astype(jnp.float32)              # (L, hd)
    sin_hs = (sin[:, perm_head] * sign).astype(jnp.float32)     # (L, hd)

    qb = q.astype(jnp.bfloat16)
    kb = k.astype(jnp.bfloat16)
    vb = v.astype(jnp.bfloat16)

    n_q = L // block_q
    n_kv = L // block_k

    # -------- Stage 1: rotated per-head K and per-head V, (B, H, L, hd) bf16.
    kv_grid = (B, n_kv, H)
    k_rot, v_head = pl.pallas_call(
        _kv_proj_kernel,
        out_shape=(jax.ShapeDtypeStruct((B, H, L, hd), jnp.bfloat16),
                   jax.ShapeDtypeStruct((B, H, L, hd), jnp.bfloat16)),
        grid_spec=pltpu.PrefetchScalarGridSpec(
            num_scalar_prefetch=0,
            grid=kv_grid,
            in_specs=[
                pl.BlockSpec((1, block_k, D), lambda b, kt, h: (b, kt, 0)),  # k
                pl.BlockSpec((1, block_k, D), lambda b, kt, h: (b, kt, 0)),  # v
                pl.BlockSpec((D, hd),         lambda b, kt, h: (0, h)),      # WkT
                pl.BlockSpec((1, hd),         lambda b, kt, h: (0, h)),      # bk
                pl.BlockSpec((D, hd),         lambda b, kt, h: (0, h)),      # WvT
                pl.BlockSpec((1, hd),         lambda b, kt, h: (0, h)),      # bv
                pl.BlockSpec((block_k, hd),   lambda b, kt, h: (kt, 0)),     # cos
                pl.BlockSpec((block_k, hd),   lambda b, kt, h: (kt, 0)),     # sin
            ],
            out_specs=(
                pl.BlockSpec((1, 1, block_k, hd), lambda b, kt, h: (b, h, kt, 0)),
                pl.BlockSpec((1, 1, block_k, hd), lambda b, kt, h: (b, h, kt, 0)),
            )),
        compiler_params=pltpu.CompilerParams(
            dimension_semantics=("parallel", "parallel", "arbitrary"),
            vmem_limit_bytes=32 * 1024 * 1024),
    )(kb, vb, wkT, bk_p, wvT, bv_p, cos_hs, sin_hs)

    # -------- Stage 2: flash attention + per-head W_o accumulation.
    attn_grid = (B, n_q, H, n_kv)
    kernel = functools.partial(_mha_attn_kernel, causal=causal,
                               scale=1.0 / math.sqrt(hd))

    out = pl.pallas_call(
        kernel,
        out_shape=jax.ShapeDtypeStruct((B, L, D), jnp.bfloat16),
        grid_spec=pltpu.PrefetchScalarGridSpec(
            num_scalar_prefetch=0,
            grid=attn_grid,
            in_specs=[
                pl.BlockSpec((1, block_q, D),     lambda b, qt, h, kt: (b, qt, 0)),     # q tile
                pl.BlockSpec((1, 1, block_k, hd), lambda b, qt, h, kt: (b, h, kt, 0)),  # K tile
                pl.BlockSpec((1, 1, block_k, hd), lambda b, qt, h, kt: (b, h, kt, 0)),  # V tile
                pl.BlockSpec((D, hd),             lambda b, qt, h, kt: (0, h)),         # WqT
                pl.BlockSpec((1, hd),             lambda b, qt, h, kt: (0, h)),         # bq
                pl.BlockSpec((hd, D),             lambda b, qt, h, kt: (h, 0)),         # WoT
                pl.BlockSpec((1, D),              lambda b, qt, h, kt: (0, 0)),         # bo
                pl.BlockSpec((block_q, hd),       lambda b, qt, h, kt: (qt, 0)),        # cos (q rows)
                pl.BlockSpec((block_q, hd),       lambda b, qt, h, kt: (qt, 0)),        # sin (q rows)
            ],
            out_specs=pl.BlockSpec((1, block_q, D), lambda b, qt, h, kt: (b, qt, 0)),
            scratch_shapes=[
                pltpu.VMEM((block_q, hd), jnp.bfloat16),   # rotated+scaled Q
                pltpu.VMEM((block_q, 1), jnp.float32),     # running max m
                pltpu.VMEM((block_q, 1), jnp.float32),     # running sum l
                pltpu.VMEM((block_q, hd), jnp.float32),    # unnormalized p@V acc
                pltpu.VMEM((block_q, D), jnp.float32),     # per-head output acc
            ]),
        compiler_params=pltpu.CompilerParams(
            dimension_semantics=("parallel", "parallel", "arbitrary", "arbitrary"),
            # Budgeted for v7x's 64 MiB VMEM (K/V are streamed tiles now).
            vmem_limit_bytes=48 * 1024 * 1024),
    )(qb, k_rot, v_head, wqT, bq_p, woT, bo_p, cos_hs, sin_hs)

    return out


# ----------------------------------------------------------------------------
# Pure-JAX f32 reference (mirrors the PyTorch forward exactly).
# ----------------------------------------------------------------------------
def mha_reference(q, k, v, params, cos, sin, *, num_heads, causal=False):
    B, L, D = q.shape
    hd = D // num_heads
    wq, bq, wk, bk, wv, bv, wo, bo = params

    def linear(x, w, b):
        return x @ w.T + b

    def split_heads(x):                                  # b l (h d) -> b h l d
        return x.reshape(B, L, num_heads, hd).transpose(0, 2, 1, 3)

    qh = split_heads(linear(q, wq, bq))
    kh = split_heads(linear(k, wk, bk))
    vh = split_heads(linear(v, wv, bv))

    def rotate_half(x):                                  # interleaved pairs
        x1 = x[..., 0::2]
        x2 = x[..., 1::2]
        return jnp.stack([-x2, x1], axis=-1).reshape(x.shape)

    qh = qh * cos + rotate_half(qh) * sin                # cos/sin: (L, hd)
    kh = kh * cos + rotate_half(kh) * sin

    att = jnp.einsum("bhld,bhtd->bhlt", qh, kh) / math.sqrt(hd)
    if causal:
        mask = jnp.tril(jnp.ones((L, L), bool))
        att = jnp.where(mask, att, -jnp.inf)
    probs = jax.nn.softmax(att, axis=-1)
    o = jnp.einsum("bhlt,bhtd->bhld", probs, vh)
    o = o.transpose(0, 2, 1, 3).reshape(B, L, D)
    return linear(o, wo, bo)


# ----------------------------------------------------------------------------
# Main
# ----------------------------------------------------------------------------
if __name__ == "__main__":
    # batch, seq, d_model, heads -> head_dim = 128 (lane-dense head blocks)
    B, L, D, H = 2, 256, 256, 2
    hd = D // H

    key = jax.random.PRNGKey(0)
    keys = jax.random.split(key, 11)
    wscale = 1.0 / math.sqrt(D)

    q = jax.random.normal(keys[0], (B, L, D), jnp.float32)
    k = jax.random.normal(keys[1], (B, L, D), jnp.float32)
    v = jax.random.normal(keys[2], (B, L, D), jnp.float32)

    wq = jax.random.normal(keys[3], (D, D), jnp.float32) * wscale
    bq = jax.random.normal(keys[4], (D,), jnp.float32) * wscale
    wk = jax.random.normal(keys[5], (D, D), jnp.float32) * wscale
    bk = jax.random.normal(keys[6], (D,), jnp.float32) * wscale
    wv = jax.random.normal(keys[7], (D, D), jnp.float32) * wscale
    bv = jax.random.normal(keys[8], (D,), jnp.float32) * wscale
    wo = jax.random.normal(keys[9], (D, D), jnp.float32) * wscale
    bo = jax.random.normal(keys[10], (D,), jnp.float32) * wscale
    params = (wq, bq, wk, bk, wv, bv, wo, bo)

    # Rotary tables (lucidrains RotaryEmbedding(dim=head_dim), theta=10000,
    # interleaved-pair convention), shape (L, head_dim) — shared by all heads.
    inv_freq = 1.0 / (10000.0 ** (jnp.arange(0, hd, 2, dtype=jnp.float32) / hd))
    t = jnp.arange(L, dtype=jnp.float32)
    freqs = jnp.repeat(jnp.outer(t, inv_freq), 2, axis=-1)      # (L, hd)
    cos = jnp.cos(freqs)
    sin = jnp.sin(freqs)

    # 1) module default (non-causal) with large blocks, 2) causal with small
    # blocks to exercise the multi-tile online-softmax / tile-skip path.
    for causal, blk_q, blk_k in [(False, 256, 256), (True, 64, 64)]:
        out = mha_pallas(q, k, v, params, cos, sin, num_heads=H,
                         causal=causal, block_q=blk_q, block_k=blk_k)
        out = jax.block_until_ready(out).astype(jnp.float32)
        ref = mha_reference(q, k, v, params, cos, sin, num_heads=H, causal=causal)
        assert out.shape == (B, L, D)
        max_diff = float(jnp.max(jnp.abs(out - ref)))
        # bf16 MXU operands / bf16 output vs f32 reference -> loose tolerance.
        assert jnp.allclose(out, ref, atol=1e-1, rtol=1e-1), (
            f"causal={causal}: max abs diff {max_diff}")

    print("KERNEL_OK")
</pallas_src>

<mosaic_0001>
module attributes {stable_mosaic.version = 11 : i64} {
  func.func @_kv_proj_kernel(%arg0: i32, %arg1: i32, %arg2: i32, %arg3: memref<1x256x256xbf16, #tpu.memory_space<vmem>>, %arg4: memref<1x256x256xbf16, #tpu.memory_space<vmem>>, %arg5: memref<256x128xbf16, #tpu.memory_space<vmem>>, %arg6: memref<1x128xf32, #tpu.memory_space<vmem>>, %arg7: memref<256x128xbf16, #tpu.memory_space<vmem>>, %arg8: memref<1x128xf32, #tpu.memory_space<vmem>>, %arg9: memref<256x128xf32, #tpu.memory_space<vmem>>, %arg10: memref<256x128xf32, #tpu.memory_space<vmem>>, %arg11: memref<1x1x256x128xbf16, #tpu.memory_space<vmem>>, %arg12: memref<1x1x256x128xbf16, #tpu.memory_space<vmem>>) attributes {dimension_semantics = [#tpu.dimension_semantics<parallel>, #tpu.dimension_semantics<parallel>, #tpu.dimension_semantics<arbitrary>], iteration_bounds = array<i64: 2, 1, 2>, scalar_prefetch = 0 : i64, scratch_operands = 0 : i64, tpu.core_type = #tpu.core_type<tc>, window_params = [{transform_indices = @transform_0, window_bounds = array<i64: 1, 256, 256>}, {transform_indices = @transform_1, window_bounds = array<i64: 1, 256, 256>}, {transform_indices = @transform_2, window_bounds = array<i64: 256, 128>}, {transform_indices = @transform_3, window_bounds = array<i64: 1, 128>}, {transform_indices = @transform_4, window_bounds = array<i64: 256, 128>}, {transform_indices = @transform_5, window_bounds = array<i64: 1, 128>}, {transform_indices = @transform_6, window_bounds = array<i64: 256, 128>}, {transform_indices = @transform_7, window_bounds = array<i64: 256, 128>}, {transform_indices = @transform_8, window_bounds = array<i64: 1, 1, 256, 128>}, {transform_indices = @transform_9, window_bounds = array<i64: 1, 1, 256, 128>}]} {
    %c0 = arith.constant 0 : index
    %c0_0 = arith.constant 0 : index
    %c0_1 = arith.constant 0 : index
    %0 = vector.load %arg3[%c0, %c0_0, %c0_1] : memref<1x256x256xbf16, #tpu.memory_space<vmem>>, vector<1x256x256xbf16>
    %1 = vector.shape_cast %0 : vector<1x256x256xbf16> to vector<256x256xbf16>
    %c0_2 = arith.constant 0 : index
    %c0_3 = arith.constant 0 : index
    %2 = vector.load %arg5[%c0_2, %c0_3] : memref<256x128xbf16, #tpu.memory_space<vmem>>, vector<256x128xbf16>
    %cst = arith.constant dense<0.000000e+00> : vector<256x128xf32>
    %3 = tpu.matmul %1, %2, %cst {dimension_numbers = #tpu.dot_dimension_numbers<[1], [0], [0], [1], [0, 0, 1, 1], [], []>} : vector<256x256xbf16>, vector<256x128xbf16>, vector<256x128xf32> -> vector<256x128xf32>
    %c0_4 = arith.constant 0 : index
    %c0_5 = arith.constant 0 : index
    %4 = vector.load %arg6[%c0_4, %c0_5] : memref<1x128xf32, #tpu.memory_space<vmem>>, vector<1x128xf32>
    %5 = vector.broadcast %4 : vector<1x128xf32> to vector<256x128xf32>
    %6 = arith.addf %3, %5 : vector<256x128xf32>
    %7 = vector.extract_strided_slice %6 {offsets = [0, 64], sizes = [256, 64], strides = [1, 1]} : vector<256x128xf32> to vector<256x64xf32>
    %8 = vector.extract_strided_slice %6 {offsets = [0, 0], sizes = [256, 64], strides = [1, 1]} : vector<256x128xf32> to vector<256x64xf32>
    %9 = tpu.concatenate %7, %8 in 1 : vector<256x64xf32>, vector<256x64xf32> -> vector<256x128xf32>
    %c0_6 = arith.constant 0 : index
    %c0_7 = arith.constant 0 : index
    %10 = vector.load %arg9[%c0_6, %c0_7] : memref<256x128xf32, #tpu.memory_space<vmem>>, vector<256x128xf32>
    %11 = arith.mulf %6, %10 : vector<256x128xf32>
    %c0_8 = arith.constant 0 : index
    %c0_9 = arith.constant 0 : index
    %12 = vector.load %arg10[%c0_8, %c0_9] : memref<256x128xf32, #tpu.memory_space<vmem>>, vector<256x128xf32>
    %13 = arith.mulf %9, %12 : vector<256x128xf32>
    %14 = arith.addf %11, %13 : vector<256x128xf32>
    %c0_10 = arith.constant 0 : index
    %c0_11 = arith.constant 0 : index
    %c0_12 = arith.constant 0 : index
    %15 = vector.load %arg4[%c0_10, %c0_11, %c0_12] : memref<1x256x256xbf16, #tpu.memory_space<vmem>>, vector<1x256x256xbf16>
    %16 = vector.shape_cast %15 : vector<1x256x256xbf16> to vector<256x256xbf16>
    %c0_13 = arith.constant 0 : index
    %c0_14 = arith.constant 0 : index
    %17 = vector.load %arg7[%c0_13, %c0_14] : memref<256x128xbf16, #tpu.memory_space<vmem>>, vector<256x128xbf16>
    %cst_15 = arith.constant dense<0.000000e+00> : vector<256x128xf32>
    %18 = tpu.matmul %16, %17, %cst_15 {dimension_numbers = #tpu.dot_dimension_numbers<[1], [0], [0], [1], [0, 0, 1, 1], [], []>} : vector<256x256xbf16>, vector<256x128xbf16>, vector<256x128xf32> -> vector<256x128xf32>
    %c0_16 = arith.constant 0 : index
    %c0_17 = arith.constant 0 : index
    %19 = vector.load %arg8[%c0_16, %c0_17] : memref<1x128xf32, #tpu.memory_space<vmem>>, vector<1x128xf32>
    %20 = vector.broadcast %19 : vector<1x128xf32> to vector<256x128xf32>
    %21 = arith.addf %18, %20 : vector<256x128xf32>
    %22 = arith.truncf %14 : vector<256x128xf32> to vector<256x128xbf16>
    %c0_18 = arith.constant 0 : index
    %c0_19 = arith.constant 0 : index
    %c0_20 = arith.constant 0 : index
    %c0_21 = arith.constant 0 : index
    %23 = vector.load %arg11[%c0_18, %c0_19, %c0_20, %c0_21] : memref<1x1x256x128xbf16, #tpu.memory_space<vmem>>, vector<1x1x256x128xbf16>
    %24 = vector.shape_cast %23 : vector<1x1x256x128xbf16> to vector<256x128xbf16>
    %25 = vector.shape_cast %22 : vector<256x128xbf16> to vector<1x1x256x128xbf16>
    tpu.vector_store %arg11[%c0_18, %c0_19, %c0_20, %c0_21], %25 {strides = array<i32>} : memref<1x1x256x128xbf16, #tpu.memory_space<vmem>>, vector<1x1x256x128xbf16>,
    %26 = arith.truncf %21 : vector<256x128xf32> to vector<256x128xbf16>
    %c0_22 = arith.constant 0 : index
    %c0_23 = arith.constant 0 : index
    %c0_24 = arith.constant 0 : index
    %c0_25 = arith.constant 0 : index
    %27 = vector.load %arg12[%c0_22, %c0_23, %c0_24, %c0_25] : memref<1x1x256x128xbf16, #tpu.memory_space<vmem>>, vector<1x1x256x128xbf16>
    %28 = vector.shape_cast %27 : vector<1x1x256x128xbf16> to vector<256x128xbf16>
    %29 = vector.shape_cast %26 : vector<256x128xbf16> to vector<1x1x256x128xbf16>
    tpu.vector_store %arg12[%c0_22, %c0_23, %c0_24, %c0_25], %29 {strides = array<i32>} : memref<1x1x256x128xbf16, #tpu.memory_space<vmem>>, vector<1x1x256x128xbf16>,
    return
  }
  func.func @transform_0(%arg0: i32, %arg1: i32, %arg2: i32) -> (i32, i32, i32) {
    %c0_i32 = arith.constant 0 : i32
    %c0_i32_0 = arith.constant 0 : i32
    return %arg0, %arg1, %c0_i32 : i32, i32, i32
  }
  func.func @transform_1(%arg0: i32, %arg1: i32, %arg2: i32) -> (i32, i32, i32) {
    %c0_i32 = arith.constant 0 : i32
    %c0_i32_0 = arith.constant 0 : i32
    return %arg0, %arg1, %c0_i32 : i32, i32, i32
  }
  func.func @transform_2(%arg0: i32, %arg1: i32, %arg2: i32) -> (i32, i32) {
    %c0_i32 = arith.constant 0 : i32
    %c0_i32_0 = arith.constant 0 : i32
    return %c0_i32, %arg2 : i32, i32
  }
  func.func @transform_3(%arg0: i32, %arg1: i32, %arg2: i32) -> (i32, i32) {
    %c0_i32 = arith.constant 0 : i32
    %c0_i32_0 = arith.constant 0 : i32
    return %c0_i32, %arg2 : i32, i32
  }
  func.func @transform_4(%arg0: i32, %arg1: i32, %arg2: i32) -> (i32, i32) {
    %c0_i32 = arith.constant 0 : i32
    %c0_i32_0 = arith.constant 0 : i32
    return %c0_i32, %arg2 : i32, i32
  }
  func.func @transform_5(%arg0: i32, %arg1: i32, %arg2: i32) -> (i32, i32) {
    %c0_i32 = arith.constant 0 : i32
    %c0_i32_0 = arith.constant 0 : i32
    return %c0_i32, %arg2 : i32, i32
  }
  func.func @transform_6(%arg0: i32, %arg1: i32, %arg2: i32) -> (i32, i32) {
    %c0_i32 = arith.constant 0 : i32
    %c0_i32_0 = arith.constant 0 : i32
    return %arg1, %c0_i32 : i32, i32
  }
  func.func @transform_7(%arg0: i32, %arg1: i32, %arg2: i32) -> (i32, i32) {
    %c0_i32 = arith.constant 0 : i32
    %c0_i32_0 = arith.constant 0 : i32
    return %arg1, %c0_i32 : i32, i32
  }
  func.func @transform_8(%arg0: i32, %arg1: i32, %arg2: i32) -> (i32, i32, i32, i32) {
    %c0_i32 = arith.constant 0 : i32
    %c0_i32_0 = arith.constant 0 : i32
    return %arg0, %arg2, %arg1, %c0_i32 : i32, i32, i32, i32
  }
  func.func @transform_9(%arg0: i32, %arg1: i32, %arg2: i32) -> (i32, i32, i32, i32) {
    %c0_i32 = arith.constant 0 : i32
    %c0_i32_0 = arith.constant 0 : i32
    return %arg0, %arg2, %arg1, %c0_i32 : i32, i32, i32, i32
  }
}

</mosaic_0001>

<llo_original>
// kernel: tpu_custom_call.1
$region0: #{tpu_custom_call.1}
  #allocation0 [shape = 'u32[]', space=smem, size = 0x4, offset = 0x4, fixed_abs, tag = 'smem constant byte address 0x4 - core index']
  #allocation1 [shape = 'u32[144,128]{1,0:T(1,128)}', space=vmem, size = 0x12000, scoped, tag = 'internal scratch']
  %s0 = inlined_call_operand.hbm [shape: bf16[2,256,256], index: 0, kind: input, shape index: {}]
  %s1 = inlined_call_operand.hbm [shape: bf16[2,256,256], index: 1, kind: input, shape index: {}]
  %s2 = inlined_call_operand.hbm [shape: bf16[256,256], index: 2, kind: input, shape index: {}]
  %s3 = inlined_call_operand.vmem [shape: f32[1,256], index: 3, kind: input, shape index: {}]
  %s4 = inlined_call_operand.hbm [shape: bf16[256,256], index: 4, kind: input, shape index: {}]
  %s5 = inlined_call_operand.vmem [shape: f32[1,256], index: 5, kind: input, shape index: {}]
  %s6 = inlined_call_operand.hbm [shape: f32[256,128], index: 6, kind: input, shape index: {}]
  %s7 = inlined_call_operand.hbm [shape: f32[256,128], index: 7, kind: input, shape index: {}]
  %s8 = inlined_call_operand.hbm [shape: bf16[2,2,256,128], index: 8, kind: output, shape index: {0}]
  %s9 = inlined_call_operand.hbm [shape: bf16[2,2,256,128], index: 9, kind: output, shape index: {1}]
  %10 = xla_tuple %s8, %s9
  %s11 = sld [smem:[#allocation0]]
  $region97: #{tpu_custom_call.1} parent=0
    _
  %s13 = ssub.s32 1, %s11
  %s14 = scalar_select 0, %s13, %s11
  $region1: #{tpu_custom_call.1} parent=0
    #allocation2 [shape = 'u8[262144]{0}', space=vmem, size = 0x40000, scoped, tag = 'input window, operand 0']
    #allocation3 [shape = 's32[2]{0}', space=sflag, size = 0x8, scoped, tag = 'scoped memory for tpu_custom_call.1']
    #allocation4 [shape = 's32[2]{0}', space=sflag, size = 0x8, scoped, tag = 'scoped memory for tpu_custom_call.1']
    #allocation5 [shape = 'u8[262144]{0}', space=vmem, size = 0x40000, scoped, tag = 'input window, operand 1']
    #allocation6 [shape = 's32[2]{0}', space=sflag, size = 0x8, scoped, tag = 'scoped memory for tpu_custom_call.1']
    #allocation7 [shape = 'u8[131072]{0}', space=vmem, size = 0x20000, scoped, tag = 'input window, operand 2']
    #allocation8 [shape = 'u8[131072]{0}', space=vmem, size = 0x20000, scoped, tag = 'input window, operand 4']
    #allocation9 [shape = 's32[2]{0}', space=sflag, size = 0x8, scoped, tag = 'scoped memory for tpu_custom_call.1']
    #allocation10 [shape = 'u8[131072]{0}', space=vmem, size = 0x20000, scoped, tag = 'input window, operand 6, single buffered']
    #allocation11 [shape = 'u8[131072]{0}', space=vmem, size = 0x20000, scoped, tag = 'input window, operand 7, single buffered']
    #allocation12 [shape = 's32[1]{0}', space=sflag, size = 0x4, scoped, tag = 'scoped memory for tpu_custom_call.1']
    #allocation13 [shape = 'u8[131072]{0}', space=vmem, size = 0x20000, scoped, tag = 'output window, operand 0']
    #allocation14 [shape = 'u8[131072]{0}', space=vmem, size = 0x20000, scoped, tag = 'output window, operand 1']
    #allocation15 [shape = 's32[2]{0}', space=sflag, size = 0x8, scoped, tag = 'scoped memory for tpu_custom_call.1']
    %15 = vsyncpa [#allocation3], 0
    %s16 = scalar_lea.sflag [#allocation3], 1
    %17 = vsyncpa %s16, 0
    %18 = vsyncpa [#allocation6], 0
    %s19 = scalar_lea.sflag [#allocation6], 1
    %20 = vsyncpa %s19, 0
    %21 = vsyncpa [#allocation9], 0
    %s22 = scalar_lea.sflag [#allocation9], 1
    %23 = vsyncpa %s22, 0
    %24 = vsyncpa [#allocation12], 0
    %25 = vsyncpa [#allocation4], 0
    %s26 = scalar_lea.sflag [#allocation4], 1
    %27 = vsyncpa %s26, 0
    %28 = vsyncpa [#allocation15], 0
    %s29 = scalar_lea.sflag [#allocation15], 1
    %30 = vsyncpa %s29, 0
    loop: start=0, step=1, limit=6
    $region2: #{tpu_custom_call.1} parent=1 // loop_pre_header
      _
    $region3: #{tpu_custom_call.1} parent=1 // loop_header
      %s32 = sphi 0, %s36
      %p33 = scmp.ge.s32.totalorder %s32, 6
      %s39 = sphi 0, %s58
      %s40 = sphi 0, %s54
      %s41 = sphi 0, %s50
      %s42 = sphi 0, %s39
      %s43 = sphi 0, %s40
      %s44 = sphi 0, %s41
      %s45 = sphi 0, %s42
      %s46 = sphi 0, %s43
      %s47 = sphi 0, %s44
      %s63 = sphi 0, %s65
      %s66 = sphi 0, %s63
      %s67 = sphi 0, %s66
      %s83 = sphi 0, %s67
      %s91 = sphi 0, %s93
      %s94 = sphi 0, %s91
      %s95 = sphi 0, %s94
      %s111 = sphi 0, %s95
      %s117 = sphi 0, %s119
      %s120 = sphi 0, %s117
      %s121 = sphi 0, %s120
      %s137 = sphi 0, %s121
      %s143 = sphi 0, %s145
      %s146 = sphi 0, %s143
      %s147 = sphi 0, %s146
      %s163 = sphi 0, %s147
      %s169 = sphi 0, %s171
      %s172 = sphi 0, %s169
      %s173 = sphi 0, %s172
      %s189 = sphi 0, %s173
      %s195 = sphi 0, %s197
      %s198 = sphi 0, %s195
      %s199 = sphi 0, %s198
      %s215 = sphi 0, %s199
      %s221 = sphi 0, %s223
      %s224 = sphi 0, %s221
      %s225 = sphi 0, %s224
      %s241 = sphi 0, %s225
      %s247 = sphi 0, %s249
      %s250 = sphi 0, %s247
      %s251 = sphi 0, %s250
      %s267 = sphi 0, %s251
      %s277 = sphi 0, %s279
      %s280 = sphi 0, %s277
      %s281 = sphi 0, %s280
      %s297 = sphi 0, %s281
      %s307 = sphi 0, %s309
      %s310 = sphi 0, %s307
      %s311 = sphi 0, %s310
      %s327 = sphi 0, %s311
    $region4: #{tpu_custom_call.1} parent=1 // loop_header_branch
      %35 = sbr.rel (%p33) target = $region8
    $region5: #{tpu_custom_call.1} parent=1 // loop_body
      %s37 = ssub.s32 %s32, 1
      %s38 = ssub.s32 %s32, 2
      %s48 = sadd.s32 1, %s41
      %p49 = scmp.ge.s32.totalorder %s48, 2
      %s50 = scalar_select %p49, 0, %s48
      %s51 = sadd.s32 1, %s40
      %s52 = scalar_select %p49, %s51, %s40
      %p53 = scmp.ge.s32.totalorder %s52, 1
      %s54 = scalar_select %p53, 0, %s52
      %s55 = sadd.s32 1, %s39
      %s56 = scalar_select %p53, %s55, %s39
      %p57 = scmp.ge.s32.totalorder %s56, 2
      %s58 = scalar_select %p57, 0, %s56
      %s59 = ssub.s32 %s39, %s58
      %s60 = ssub.s32 %s40, %s54
      %s61 = sor.u32 %s59, %s60
      %p62 = scmp.eq.s32.totalorder %s61, 0
      %s64 = sadd.s32 %s63, 1
      %s65 = scalar_select %p62, %s63, %s64
      %p68 = pneg %p62
      %p69 = scmp.eq.s32.totalorder %s32, 3
      %p70 = por %p68, %p69
      %p71 = scmp.ne.s32.totalorder %s63, %s66
      %p72 = scmp.eq.s32.totalorder %s32, 0
      %p73 = por %p71, %p72
      %p74 = scmp.ne.s32.totalorder %s63, %s66
      %p75 = scmp.eq.s32.totalorder %s37, 3
      %p76 = por %p74, %p75
      %p77 = scmp.ne.s32.totalorder %s66, %s67
      %p78 = scmp.eq.s32.totalorder %s37, 0
      %p79 = por %p77, %p78
      %p80 = scmp.ne.s32.totalorder %s66, %s67
      %p81 = scmp.eq.s32.totalorder %s38, 3
      %p82 = por %p80, %p81
      %p84 = scmp.ne.s32.totalorder %s67, %s83
      %p85 = scmp.eq.s32.totalorder %s38, 0
      %p86 = por %p84, %p85
      %s87 = ssub.s32 %s39, %s58
      %s88 = ssub.s32 %s40, %s54
      %s89 = sor.u32 %s87, %s88
      %p90 = scmp.eq.s32.totalorder %s89, 0
      %s92 = sadd.s32 %s91, 1
      %s93 = scalar_select %p90, %s91, %s92
      %p96 = pneg %p90
      %p97 = scmp.eq.s32.totalorder %s32, 3
      %p98 = por %p96, %p97
      %p99 = scmp.ne.s32.totalorder %s91, %s94
      %p100 = scmp.eq.s32.totalorder %s32, 0
      %p101 = por %p99, %p100
      %p102 = scmp.ne.s32.totalorder %s91, %s94
      %p103 = scmp.eq.s32.totalorder %s37, 3
      %p104 = por %p102, %p103
      %p105 = scmp.ne.s32.totalorder %s94, %s95
      %p106 = scmp.eq.s32.totalorder %s37, 0
      %p107 = por %p105, %p106
      %p108 = scmp.ne.s32.totalorder %s94, %s95
      %p109 = scmp.eq.s32.totalorder %s38, 3
      %p110 = por %p108, %p109
      %p112 = scmp.ne.s32.totalorder %s95, %s111
      %p113 = scmp.eq.s32.totalorder %s38, 0
      %p114 = por %p112, %p113
      %s115 = ssub.s32 %s41, %s50
      %p116 = scmp.eq.s32.totalorder %s115, 0
      %s118 = sadd.s32 %s117, 1
      %s119 = scalar_select %p116, %s117, %s118
      %p122 = pneg %p116
      %p123 = scmp.eq.s32.totalorder %s32, 3
      %p124 = por %p122, %p123
      %p125 = scmp.ne.s32.totalorder %s117, %s120
      %p126 = scmp.eq.s32.totalorder %s32, 0
      %p127 = por %p125, %p126
      %p128 = scmp.ne.s32.totalorder %s117, %s120
      %p129 = scmp.eq.s32.totalorder %s37, 3
      %p130 = por %p128, %p129
      %p131 = scmp.ne.s32.totalorder %s120, %s121
      %p132 = scmp.eq.s32.totalorder %s37, 0
      %p133 = por %p131, %p132
      %p134 = scmp.ne.s32.totalorder %s120, %s121
      %p135 = scmp.eq.s32.totalorder %s38, 3
      %p136 = por %p134, %p135
      %p138 = scmp.ne.s32.totalorder %s121, %s137
      %p139 = scmp.eq.s32.totalorder %s38, 0
      %p140 = por %p138, %p139
      %s141 = ssub.s32 %s41, %s50
      %p142 = scmp.eq.s32.totalorder %s141, 0
      %s144 = sadd.s32 %s143, 1
      %s145 = scalar_select %p142, %s143, %s144
      %p148 = pneg %p142
      %p149 = scmp.eq.s32.totalorder %s32, 3
      %p150 = por %p148, %p149
      %p151 = scmp.ne.s32.totalorder %s143, %s146
      %p152 = scmp.eq.s32.totalorder %s32, 0
      %p153 = por %p151, %p152
      %p154 = scmp.ne.s32.totalorder %s143, %s146
      %p155 = scmp.eq.s32.totalorder %s37, 3
      %p156 = por %p154, %p155
      %p157 = scmp.ne.s32.totalorder %s146, %s147
      %p158 = scmp.eq.s32.totalorder %s37, 0
      %p159 = por %p157, %p158
      %p160 = scmp.ne.s32.totalorder %s146, %s147
      %p161 = scmp.eq.s32.totalorder %s38, 3
      %p162 = por %p160, %p161
      %p164 = scmp.ne.s32.totalorder %s147, %s163
      %p165 = scmp.eq.s32.totalorder %s38, 0
      %p166 = por %p164, %p165
      %s167 = ssub.s32 %s41, %s50
      %p168 = scmp.eq.s32.totalorder %s167, 0
      %s170 = sadd.s32 %s169, 1
      %s171 = scalar_select %p168, %s169, %s170
      %p174 = pneg %p168
      %p175 = scmp.eq.s32.totalorder %s32, 3
      %p176 = por %p174, %p175
      %p177 = scmp.ne.s32.totalorder %s169, %s172
      %p178 = scmp.eq.s32.totalorder %s32, 0
      %p179 = por %p177, %p178
      %p180 = scmp.ne.s32.totalorder %s169, %s172
      %p181 = scmp.eq.s32.totalorder %s37, 3
      %p182 = por %p180, %p181
      %p183 = scmp.ne.s32.totalorder %s172, %s173
      %p184 = scmp.eq.s32.totalorder %s37, 0
      %p185 = por %p183, %p184
      %p186 = scmp.ne.s32.totalorder %s172, %s173
      %p187 = scmp.eq.s32.totalorder %s38, 3
      %p188 = por %p186, %p187
      %p190 = scmp.ne.s32.totalorder %s173, %s189
      %p191 = scmp.eq.s32.totalorder %s38, 0
      %p192 = por %p190, %p191
      %s193 = ssub.s32 %s41, %s50
      %p194 = scmp.eq.s32.totalorder %s193, 0
      %s196 = sadd.s32 %s195, 1
      %s197 = scalar_select %p194, %s195, %s196
      %p200 = pneg %p194
      %p201 = scmp.eq.s32.totalorder %s32, 3
      %p202 = por %p200, %p201
      %p203 = scmp.ne.s32.totalorder %s195, %s198
      %p204 = scmp.eq.s32.totalorder %s32, 0
      %p205 = por %p203, %p204
      %p206 = scmp.ne.s32.totalorder %s195, %s198
      %p207 = scmp.eq.s32.totalorder %s37, 3
      %p208 = por %p206, %p207
      %p209 = scmp.ne.s32.totalorder %s198, %s199
      %p210 = scmp.eq.s32.totalorder %s37, 0
      %p211 = por %p209, %p210
      %p212 = scmp.ne.s32.totalorder %s198, %s199
      %p213 = scmp.eq.s32.totalorder %s38, 3
      %p214 = por %p212, %p213
      %p216 = scmp.ne.s32.totalorder %s199, %s215
      %p217 = scmp.eq.s32.totalorder %s38, 0
      %p218 = por %p216, %p217
      %s219 = ssub.s32 %s40, %s54
      %p220 = scmp.eq.s32.totalorder %s219, 0
      %s222 = sadd.s32 %s221, 1
      %s223 = scalar_select %p220, %s221, %s222
      %p226 = pneg %p220
      %p227 = scmp.eq.s32.totalorder %s32, 3
      %p228 = por %p226, %p227
      %p229 = scmp.ne.s32.totalorder %s221, %s224
      %p230 = scmp.eq.s32.totalorder %s32, 0
      %p231 = por %p229, %p230
      %p232 = scmp.ne.s32.totalorder %s221, %s224
      %p233 = scmp.eq.s32.totalorder %s37, 3
      %p234 = por %p232, %p233
      %p235 = scmp.ne.s32.totalorder %s224, %s225
      %p236 = scmp.eq.s32.totalorder %s37, 0
      %p237 = por %p235, %p236
      %p238 = scmp.ne.s32.totalorder %s224, %s225
      %p239 = scmp.eq.s32.totalorder %s38, 3
      %p240 = por %p238, %p239
      %p242 = scmp.ne.s32.totalorder %s225, %s241
      %p243 = scmp.eq.s32.totalorder %s38, 0
      %p244 = por %p242, %p243
      %s245 = ssub.s32 %s40, %s54
      %p246 = scmp.eq.s32.totalorder %s245, 0
      %s248 = sadd.s32 %s247, 1
      %s249 = scalar_select %p246, %s247, %s248
      %p252 = pneg %p246
      %p253 = scmp.eq.s32.totalorder %s32, 3
      %p254 = por %p252, %p253
      %p255 = scmp.ne.s32.totalorder %s247, %s250
      %p256 = scmp.eq.s32.totalorder %s32, 0
      %p257 = por %p255, %p256
      %p258 = scmp.ne.s32.totalorder %s247, %s250
      %p259 = scmp.eq.s32.totalorder %s37, 3
      %p260 = por %p258, %p259
      %p261 = scmp.ne.s32.totalorder %s250, %s251
      %p262 = scmp.eq.s32.totalorder %s37, 0
      %p263 = por %p261, %p262
      %p264 = scmp.ne.s32.totalorder %s250, %s251
      %p265 = scmp.eq.s32.totalorder %s38, 3
      %p266 = por %p264, %p265
      %p268 = scmp.ne.s32.totalorder %s251, %s267
      %p269 = scmp.eq.s32.totalorder %s38, 0
      %p270 = por %p268, %p269
      %s271 = ssub.s32 %s39, %s58
      %s272 = ssub.s32 %s41, %s50
      %s273 = sor.u32 %s271, %s272
      %s274 = ssub.s32 %s40, %s54
      %s275 = sor.u32 %s273, %s274
      %p276 = scmp.eq.s32.totalorder %s275, 0
      %s278 = sadd.s32 %s277, 1
      %s279 = scalar_select %p276, %s277, %s278
      %p282 = pneg %p276
      %p283 = scmp.eq.s32.totalorder %s32, 3
      %p284 = por %p282, %p283
      %p285 = scmp.ne.s32.totalorder %s277, %s280
      %p286 = scmp.eq.s32.totalorder %s32, 0
      %p287 = por %p285, %p286
      %p288 = scmp.ne.s32.totalorder %s277, %s280
      %p289 = scmp.eq.s32.totalorder %s37, 3
      %p290 = por %p288, %p289
      %p291 = scmp.ne.s32.totalorder %s280, %s281
      %p292 = scmp.eq.s32.totalorder %s37, 0
      %p293 = por %p291, %p292
      %p294 = scmp.ne.s32.totalorder %s280, %s281
      %p295 = scmp.eq.s32.totalorder %s38, 3
      %p296 = por %p294, %p295
      %p298 = scmp.ne.s32.totalorder %s281, %s297
      %p299 = scmp.eq.s32.totalorder %s38, 0
      %p300 = por %p298, %p299
      %s301 = ssub.s32 %s39, %s58
      %s302 = ssub.s32 %s41, %s50
      %s303 = sor.u32 %s301, %s302
      %s304 = ssub.s32 %s40, %s54
      %s305 = sor.u32 %s303, %s304
      %p306 = scmp.eq.s32.totalorder %s305, 0
      %s308 = sadd.s32 %s307, 1
      %s309 = scalar_select %p306, %s307, %s308
      %p312 = pneg %p306
      %p313 = scmp.eq.s32.totalorder %s32, 3
      %p314 = por %p312, %p313
      %p315 = scmp.ne.s32.totalorder %s307, %s310
      %p316 = scmp.eq.s32.totalorder %s32, 0
      %p317 = por %p315, %p316
      %p318 = scmp.ne.s32.totalorder %s307, %s310
      %p319 = scmp.eq.s32.totalorder %s37, 3
      %p320 = por %p318, %p319
      %p321 = scmp.ne.s32.totalorder %s310, %s311
      %p322 = scmp.eq.s32.totalorder %s37, 0
      %p323 = por %p321, %p322
      %p324 = scmp.ne.s32.totalorder %s310, %s311
      %p325 = scmp.eq.s32.totalorder %s38, 3
      %p326 = por %p324, %p325
      %p328 = scmp.ne.s32.totalorder %s311, %s327
      %p329 = scmp.eq.s32.totalorder %s38, 0
      %p330 = por %p328, %p329
      %p331 = scmp.le.s32.totalorder 1, %s32
      %p332 = scmp.lt.s32.totalorder %s32, 5
      %p333 = pnand %p331, %p332
      %p334 = pneg %p333
      // Predicated region
      $region9: #{tpu_custom_call.1} parent=5 // pred_check
        _
      $region10: #{tpu_custom_call.1} parent=5 // pred_check_branch
        %336 = sbr.rel (%p333) target = $region12
      $region11: #{tpu_custom_call.1} parent=5 // pred_region
        %s337 = ssub.s32 %s32, 1
        // Predicated region
        $region13: #{tpu_custom_call.1} parent=11 // pred_check
          %p338 = pneg %p237
        $region14: #{tpu_custom_call.1} parent=11 // pred_check_branch
          %340 = sbr.rel (%p338) target = $region16
        $region15: #{tpu_custom_call.1} parent=11 // pred_region
          %s341 = smul.u32 32, %s43
          %s343 = ssub.s32 4096, 4096
          %344 = vsyncadd [#allocation9], %s343
          %s345 = smul.addr %s341, 128
          %s346 = scalar_lea.hbm %s6, %s345
          %s347 = sshll.u32 [#allocation10], 4
          %s348 = int_to_ptr.vmem [resolvable:$true] %s347
          %353 = dma.hbm_to_vmem [thread:$0]  %s346, 4096, %s348, [#allocation9], 128, 128, 8
        $region16: #{tpu_custom_call.1} parent=11 // pred_fallthru
          _
        // Predicated region
        $region17: #{tpu_custom_call.1} parent=11 // pred_check
          %p354 = pneg %p263
        $region18: #{tpu_custom_call.1} parent=11 // pred_check_branch
          %356 = sbr.rel (%p354) target = $region20
        $region19: #{tpu_custom_call.1} parent=11 // pred_region
          %s357 = smul.u32 32, %s43
          %s359 = ssub.s32 4096, 4096
          %360 = vsyncadd [#allocation12], %s359
          %s361 = smul.addr %s357, 128
          %s362 = scalar_lea.hbm %s7, %s361
          %s363 = sshll.u32 [#allocation11], 4
          %s364 = int_to_ptr.vmem [resolvable:$true] %s363
          %369 = dma.hbm_to_vmem [thread:$0]  %s362, 4096, %s364, [#allocation12], 128, 128, 8
        $region20: #{tpu_custom_call.1} parent=11 // pred_fallthru
          _
      $region12: #{tpu_custom_call.1} parent=5 // pred_fallthru
        _
      %p370 = scmp.lt.s32.totalorder %s32, 4
      // Predicated region
      $region21: #{tpu_custom_call.1} parent=5 // pred_check
        %p371 = pneg %p370
      $region22: #{tpu_custom_call.1} parent=5 // pred_check_branch
        %373 = sbr.rel (%p371) target = $region24
      $region23: #{tpu_custom_call.1} parent=5 // pred_region
        // Predicated region
        $region25: #{tpu_custom_call.1} parent=23 // pred_check
          %p374 = pneg %p73
        $region26: #{tpu_custom_call.1} parent=23 // pred_check_branch
          %376 = sbr.rel (%p374) target = $region28
        $region27: #{tpu_custom_call.1} parent=23 // pred_region
          %s377 = sand.u32 %s63, 1
          %s378 = scalar_lea.sflag [#allocation3], %s377
          %s379 = sand.u32 %s63, 1
          %s380 = smul.addr %s379, 256
          %s381 = scalar_lea.vmem [#allocation2], %s380
          %s382 = smul.u32 32, %s40
          %s384 = ssub.s32 4096, 4096
          %385 = vsyncadd %s378, %s384
          %s386 = smul.addr %s382, 2
          %s387 = smul.addr %s39, 64
          %s388 = sadd.s32 %s386, %s387
          %s389 = smul.addr %s388, 64
          %s390 = scalar_lea.hbm %s0, %s389
          %s391 = sshll.u32 %s381, 4
          %s392 = int_to_ptr.vmem [resolvable:$true] %s391
          %397 = dma.hbm_to_vmem [thread:$0]  %s390, 4096, %s392, %s378, 128, 128, 8
        $region28: #{tpu_custom_call.1} parent=23 // pred_fallthru
          _
        // Predicated region
        $region29: #{tpu_custom_call.1} parent=23 // pred_check
          %p398 = pneg %p101
        $region30: #{tpu_custom_call.1} parent=23 // pred_check_branch
          %400 = sbr.rel (%p398) target = $region32
        $region31: #{tpu_custom_call.1} parent=23 // pred_region
          %s401 = sand.u32 %s32, 1
          %s402 = scalar_lea.sflag [#allocation6], %s401
          %s403 = sand.u32 %s91, 1
          %s404 = smul.addr %s403, 256
          %s405 = scalar_lea.vmem [#allocation5], %s404
          %s406 = smul.u32 32, %s40
          %s408 = ssub.s32 4096, 4096
          %409 = vsyncadd %s402, %s408
          %s410 = smul.addr %s406, 2
          %s411 = smul.addr %s39, 64
          %s412 = sadd.s32 %s410, %s411
          %s413 = smul.addr %s412, 64
          %s414 = scalar_lea.hbm %s1, %s413
          %s415 = sshll.u32 %s405, 4
          %s416 = int_to_ptr.vmem [resolvable:$true] %s415
          %421 = dma.hbm_to_vmem [thread:$0]  %s414, 4096, %s416, %s402, 128, 128, 8
        $region32: #{tpu_custom_call.1} parent=23 // pred_fallthru
          _
        // Predicated region
        $region33: #{tpu_custom_call.1} parent=23 // pred_check
          %p422 = pneg %p127
        $region34: #{tpu_custom_call.1} parent=23 // pred_check_branch
          %424 = sbr.rel (%p422) target = $region36
        $region35: #{tpu_custom_call.1} parent=23 // pred_region
          %s425 = sand.u32 %s32, 1
          %s426 = scalar_lea.sflag [#allocation6], %s425
          %s427 = sand.u32 %s117, 1
          %s428 = smul.addr %s427, 128
          %s429 = scalar_lea.vmem [#allocation7], %s428
          %s431 = ssub.s32 2048, 2048
          %432 = vsyncadd %s426, %s431
          %s433 = smul.addr %s41, 64
          %s434 = scalar_lea.hbm %s2, %s433
          %s435 = sshll.u32 %s429, 4
          %s436 = int_to_ptr.vmem [resolvable:$true] %s435
          %441 = dma.hbm_to_vmem [thread:$0]  %s434, 2048, %s436, %s426, 128, 64, 4
        $region36: #{tpu_custom_call.1} parent=23 // pred_fallthru
          _
        // Predicated region
        $region37: #{tpu_custom_call.1} parent=23 // pred_check
          %p442 = pneg %p153
        $region38: #{tpu_custom_call.1} parent=23 // pred_check_branch
          %444 = sbr.rel (%p442) target = $region40
        $region39: #{tpu_custom_call.1} parent=23 // pred_region
          %p445 = scmp.lt.s32.totalorder %s41, 1
          %s446 = scalar_select %p445, %s41, 1
          %s447 = scalar_lea.vmem %s3, %s446
        $region40: #{tpu_custom_call.1} parent=23 // pred_fallthru
          _
        // Predicated region
        $region41: #{tpu_custom_call.1} parent=23 // pred_check
          %p448 = pneg %p179
        $region42: #{tpu_custom_call.1} parent=23 // pred_check_branch
          %450 = sbr.rel (%p448) target = $region44
        $region43: #{tpu_custom_call.1} parent=23 // pred_region
          %s451 = sand.u32 %s32, 1
          %s452 = scalar_lea.sflag [#allocation9], %s451
          %s453 = sand.u32 %s169, 1
          %s454 = smul.addr %s453, 128
          %s455 = scalar_lea.vmem [#allocation8], %s454
          %s457 = ssub.s32 2048, 2048
          %458 = vsyncadd %s452, %s457
          %s459 = smul.addr %s41, 64
          %s460 = scalar_lea.hbm %s4, %s459
          %s461 = sshll.u32 %s455, 4
          %s462 = int_to_ptr.vmem [resolvable:$true] %s461
          %467 = dma.hbm_to_vmem [thread:$0]  %s460, 2048, %s462, %s452, 128, 64, 4
        $region44: #{tpu_custom_call.1} parent=23 // pred_fallthru
          _
        // Predicated region
        $region45: #{tpu_custom_call.1} parent=23 // pred_check
          %p468 = pneg %p205
        $region46: #{tpu_custom_call.1} parent=23 // pred_check_branch
          %470 = sbr.rel (%p468) target = $region48
        $region47: #{tpu_custom_call.1} parent=23 // pred_region
          %p471 = scmp.lt.s32.totalorder %s41, 1
          %s472 = scalar_select %p471, %s41, 1
          %s473 = scalar_lea.vmem %s5, %s472
        $region48: #{tpu_custom_call.1} parent=23 // pred_fallthru
          _
      $region24: #{tpu_custom_call.1} parent=5 // pred_fallthru
        _
      %p474 = scmp.le.s32.totalorder 1, %s32
      %p475 = scmp.lt.s32.totalorder %s32, 5
      %p476 = pnand %p474, %p475
      %p477 = pneg %p476
      // Predicated region
      $region49: #{tpu_custom_call.1} parent=5 // pred_check
        _
      $region50: #{tpu_custom_call.1} parent=5 // pred_check_branch
        %479 = sbr.rel (%p476) target = $region52
      $region51: #{tpu_custom_call.1} parent=5 // pred_region
        %s480 = ssub.s32 %s32, 1
        %s481 = sand.u32 %s66, 1
        %s482 = scalar_lea.sflag [#allocation3], %s481
        %s483 = sand.u32 %s66, 1
        %s484 = smul.addr %s483, 256
        %s485 = scalar_lea.vmem [#allocation2], %s484
        // Predicated region
        $region53: #{tpu_custom_call.1} parent=51 // pred_check
          %p486 = pneg %p79
        $region54: #{tpu_custom_call.1} parent=51 // pred_check_branch
          %488 = sbr.rel (%p486) target = $region56
        $region55: #{tpu_custom_call.1} parent=51 // pred_region
          %489 = dma.done %s482, 4096
        $region56: #{tpu_custom_call.1} parent=51 // pred_fallthru
          _
        %s490 = sand.u32 %s37, 1
        %s491 = scalar_lea.sflag [#allocation6], %s490
        %s492 = sand.u32 %s94, 1
        %s493 = smul.addr %s492, 256
        %s494 = scalar_lea.vmem [#allocation5], %s493
        // Predicated region
        $region57: #{tpu_custom_call.1} parent=51 // pred_check
          %p495 = pneg %p107
        $region58: #{tpu_custom_call.1} parent=51 // pred_check_branch
          %497 = sbr.rel (%p495) target = $region60
        $region59: #{tpu_custom_call.1} parent=51 // pred_region
          %498 = dma.done %s491, 4096
        $region60: #{tpu_custom_call.1} parent=51 // pred_fallthru
          _
        %s499 = sand.u32 %s37, 1
        %s500 = scalar_lea.sflag [#allocation6], %s499
        %s501 = sand.u32 %s120, 1
        %s502 = smul.addr %s501, 128
        %s503 = scalar_lea.vmem [#allocation7], %s502
        // Predicated region
        $region61: #{tpu_custom_call.1} parent=51 // pred_check
          %p504 = pneg %p133
        $region62: #{tpu_custom_call.1} parent=51 // pred_check_branch
          %506 = sbr.rel (%p504) target = $region64
        $region63: #{tpu_custom_call.1} parent=51 // pred_region
          %507 = dma.done %s500, 2048
        $region64: #{tpu_custom_call.1} parent=51 // pred_fallthru
          _
        %s508 = sand.u32 %s37, 1
        %s509 = scalar_lea.sflag [#allocation9], %s508
        %s510 = sand.u32 %s172, 1
        %s511 = smul.addr %s510, 128
        %s512 = scalar_lea.vmem [#allocation8], %s511
        // Predicated region
        $region65: #{tpu_custom_call.1} parent=51 // pred_check
          %p513 = pneg %p185
        $region66: #{tpu_custom_call.1} parent=51 // pred_check_branch
          %515 = sbr.rel (%p513) target = $region68
        $region67: #{tpu_custom_call.1} parent=51 // pred_region
          %516 = dma.done %s509, 2048
        $region68: #{tpu_custom_call.1} parent=51 // pred_fallthru
          _
        // Predicated region
        $region69: #{tpu_custom_call.1} parent=51 // pred_check
          %p517 = pneg %p237
        $region70: #{tpu_custom_call.1} parent=51 // pred_check_branch
          %519 = sbr.rel (%p517) target = $region72
        $region71: #{tpu_custom_call.1} parent=51 // pred_region
          %520 = dma.done [#allocation9], 4096
        $region72: #{tpu_custom_call.1} parent=51 // pred_fallthru
          _
        // Predicated region
        $region73: #{tpu_custom_call.1} parent=51 // pred_check
          %p521 = pneg %p263
        $region74: #{tpu_custom_call.1} parent=51 // pred_check_branch
          %523 = sbr.rel (%p521) target = $region76
        $region75: #{tpu_custom_call.1} parent=51 // pred_region
          %524 = dma.done [#allocation12], 4096
        $region76: #{tpu_custom_call.1} parent=51 // pred_fallthru
          _
        %s525 = sand.u32 %s66, 1
        %s526 = scalar_lea.sflag [#allocation3], %s525
        %s527 = sand.u32 %s66, 1
        %s528 = smul.addr %s527, 256
        %s529 = scalar_lea.vmem [#allocation2], %s528
        %p530 = pneg %p79
        %p531 = pneg %p76
        %s532 = sand.u32 %s37, 1
        %s533 = scalar_lea.sflag [#allocation6], %s532
        %s534 = sand.u32 %s94, 1
        %s535 = smul.addr %s534, 256
        %s536 = scalar_lea.vmem [#allocation5], %s535
        %p537 = pneg %p107
        %p538 = pneg %p104
        %s539 = sand.u32 %s37, 1
        %s540 = scalar_lea.sflag [#allocation6], %s539
        %s541 = sand.u32 %s120, 1
        %s542 = smul.addr %s541, 128
        %s543 = scalar_lea.vmem [#allocation7], %s542
        %p544 = pneg %p133
        %p545 = pneg %p130
        %p546 = scmp.lt.s32.totalorder %s44, 1
        %s547 = scalar_select %p546, %s44, 1
        %s548 = scalar_lea.vmem %s3, %s547
        %p549 = pneg %p159
        %p550 = pneg %p156
        %s551 = sand.u32 %s37, 1
        %s552 = scalar_lea.sflag [#allocation9], %s551
        %s553 = sand.u32 %s172, 1
        %s554 = smul.addr %s553, 128
        %s555 = scalar_lea.vmem [#allocation8], %s554
        %p556 = pneg %p185
        %p557 = pneg %p182
        %p558 = scmp.lt.s32.totalorder %s44, 1
        %s559 = scalar_select %p558, %s44, 1
        %s560 = scalar_lea.vmem %s5, %s559
        %p561 = pneg %p211
        %p562 = pneg %p208
        %p563 = pneg %p237
        %p564 = pneg %p234
        %p565 = pneg %p263
        %p566 = pneg %p260
        %p567 = pneg %p293
        %p568 = pneg %p290
        %s569 = sand.u32 %s280, 1
        %s570 = scalar_lea.sflag [#allocation4], %s569
        %s571 = sand.u32 %s280, 1
        %s572 = smul.addr %s571, 128
        %s573 = scalar_lea.vmem [#allocation13], %s572
        %p574 = pneg %p323
        %p575 = pneg %p320
        %s576 = sand.u32 %s310, 1
        %s577 = scalar_lea.sflag [#allocation15], %s576
        %s578 = sand.u32 %s310, 1
        %s579 = smul.addr %s578, 128
        %s580 = scalar_lea.vmem [#allocation14], %s579
        %s581 = smul.u32 32, %s43
        %s582 = smul.u32 32, %s43
        %p583 = scmp.lt.s32.totalorder %s44, 1
        %s584 = scalar_select %p583, %s44, 1
        %s585 = scalar_lea.vmem %s3, %s584
        %p586 = scmp.lt.s32.totalorder %s44, 1
        %s587 = scalar_select %p586, %s44, 1
        %s588 = scalar_lea.vmem %s5, %s587
        %s589 = smul.u32 32, %s43
        %s590 = smul.u32 32, %s43
        %s591 = smul.u32 32, %s43
        %s592 = smul.u32 32, %s43
        %v594 = vld [vmem:[%s485] sm:$0xff]
        %v595 = vld [vmem:[%s485 + $0x8] sm:$0xff]
        %v596 = vld [vmem:[%s485 + $0x10] sm:$0xff]
        %v597 = vld [vmem:[%s485 + $0x18] sm:$0xff]
        %v598 = vld [vmem:[%s485 + $0x20] sm:$0xff]
        %v599 = vld [vmem:[%s485 + $0x28] sm:$0xff]
        %v600 = vld [vmem:[%s485 + $0x30] sm:$0xff]
        %v601 = vld [vmem:[%s485 + $0x38] sm:$0xff]
        %v602 = vld [vmem:[%s485 + $0x40] sm:$0xff]
        %v603 = vld [vmem:[%s485 + $0x48] sm:$0xff]
        %v604 = vld [vmem:[%s485 + $0x50] sm:$0xff]
        %v605 = vld [vmem:[%s485 + $0x58] sm:$0xff]
        %v606 = vld [vmem:[%s485 + $0x60] sm:$0xff]
        %v607 = vld [vmem:[%s485 + $0x68] sm:$0xff]
        %v608 = vld [vmem:[%s485 + $0x70] sm:$0xff]
        %v609 = vld [vmem:[%s485 + $0x78] sm:$0xff]
        %v610 = vld [vmem:[%s485 + $0x80] sm:$0xff]
        %v611 = vld [vmem:[%s485 + $0x88] sm:$0xff]
        %v612 = vld [vmem:[%s485 + $0x90] sm:$0xff]
        %v613 = vld [vmem:[%s485 + $0x98] sm:$0xff]
        %v614 = vld [vmem:[%s485 + $0xa0] sm:$0xff]
        %v615 = vld [vmem:[%s485 + $0xa8] sm:$0xff]
        %v616 = vld [vmem:[%s485 + $0xb0] sm:$0xff]
        %v617 = vld [vmem:[%s485 + $0xb8] sm:$0xff]
        %v618 = vld [vmem:[%s485 + $0xc0] sm:$0xff]
        %v619 = vld [vmem:[%s485 + $0xc8] sm:$0xff]
        %v620 = vld [vmem:[%s485 + $0xd0] sm:$0xff]
        %v621 = vld [vmem:[%s485 + $0xd8] sm:$0xff]
        %v622 = vld [vmem:[%s485 + $0xe0] sm:$0xff]
        %v623 = vld [vmem:[%s485 + $0xe8] sm:$0xff]
        %v624 = vld [vmem:[%s485 + $0xf0] sm:$0xff]
        %v625 = vld [vmem:[%s485 + $0xf8] sm:$0xff]
        %v626 = vld [vmem:[%s503] sm:$0xf]
        %v627 = vld [vmem:[%s503 + $0x4] sm:$0xf]
        %v628 = vld [vmem:[%s503 + $0x8] sm:$0xf]
        %v629 = vld [vmem:[%s503 + $0xc] sm:$0xf]
        %v630 = vld [vmem:[%s503 + $0x10] sm:$0xf]
        %v631 = vld [vmem:[%s503 + $0x14] sm:$0xf]
        %v632 = vld [vmem:[%s503 + $0x18] sm:$0xf]
        %v633 = vld [vmem:[%s503 + $0x1c] sm:$0xf]
        %v634 = vld [vmem:[%s503 + $0x20] sm:$0xf]
        %v635 = vld [vmem:[%s503 + $0x24] sm:$0xf]
        %v636 = vld [vmem:[%s503 + $0x28] sm:$0xf]
        %v637 = vld [vmem:[%s503 + $0x2c] sm:$0xf]
        %v638 = vld [vmem:[%s503 + $0x30] sm:$0xf]
        %v639 = vld [vmem:[%s503 + $0x34] sm:$0xf]
        %v640 = vld [vmem:[%s503 + $0x38] sm:$0xf]
        %v641 = vld [vmem:[%s503 + $0x3c] sm:$0xf]
        %v642 = vld [vmem:[%s503 + $0x40] sm:$0xf]
        %v643 = vld [vmem:[%s503 + $0x44] sm:$0xf]
        %v644 = vld [vmem:[%s503 + $0x48] sm:$0xf]
        %v645 = vld [vmem:[%s503 + $0x4c] sm:$0xf]
        %v646 = vld [vmem:[%s503 + $0x50] sm:$0xf]
        %v647 = vld [vmem:[%s503 + $0x54] sm:$0xf]
        %v648 = vld [vmem:[%s503 + $0x58] sm:$0xf]
        %v649 = vld [vmem:[%s503 + $0x5c] sm:$0xf]
        %v650 = vld [vmem:[%s503 + $0x60] sm:$0xf]
        %v651 = vld [vmem:[%s503 + $0x64] sm:$0xf]
        %v652 = vld [vmem:[%s503 + $0x68] sm:$0xf]
        %v653 = vld [vmem:[%s503 + $0x6c] sm:$0xf]
        %v654 = vld [vmem:[%s503 + $0x70] sm:$0xf]
        %v655 = vld [vmem:[%s503 + $0x74] sm:$0xf]
        %v656 = vld [vmem:[%s503 + $0x78] sm:$0xf]
        %v657 = vld [vmem:[%s503 + $0x7c] sm:$0xf]
        %v658 = vld [vmem:[%s585] sm:$0x1]
        %v660 = vlaneseq
        %v661 = vshrl.u32 %v660, 7
        %v662 = vsub.s32 0, %v661
        %v663 = vrot.slane %v658, %v662
        %v697 = vunpack.c.l.b16 %v594
        %v698 = vunpack.c.h.b16 %v594
        %v699 = vunpack.c.l.b16 %v595
        %v700 = vunpack.c.h.b16 %v595
        %v701 = vunpack.c.l.b16 %v596
        %v702 = vunpack.c.h.b16 %v596
        %v703 = vunpack.c.l.b16 %v597
        %v704 = vunpack.c.h.b16 %v597
        %v705 = vunpack.c.l.b16 %v598
        %v706 = vunpack.c.h.b16 %v598
        %v707 = vunpack.c.l.b16 %v599
        %v708 = vunpack.c.h.b16 %v599
        %v709 = vunpack.c.l.b16 %v600
        %v710 = vunpack.c.h.b16 %v600
        %v711 = vunpack.c.l.b16 %v601
        %v712 = vunpack.c.h.b16 %v601
        %v713 = vunpack.c.l.b16 %v602
        %v714 = vunpack.c.h.b16 %v602
        %v715 = vunpack.c.l.b16 %v603
        %v716 = vunpack.c.h.b16 %v603
        %v717 = vunpack.c.l.b16 %v604
        %v718 = vunpack.c.h.b16 %v604
        %v719 = vunpack.c.l.b16 %v605
        %v720 = vunpack.c.h.b16 %v605
        %v721 = vunpack.c.l.b16 %v606
        %v722 = vunpack.c.h.b16 %v606
        %v723 = vunpack.c.l.b16 %v607
        %v724 = vunpack.c.h.b16 %v607
        %v725 = vunpack.c.l.b16 %v608
        %v726 = vunpack.c.h.b16 %v608
        %v727 = vunpack.c.l.b16 %v609
        %v728 = vunpack.c.h.b16 %v609
        %v729 = vunpack.c.l.b16 %v610
        %v730 = vunpack.c.h.b16 %v610
        %v731 = vunpack.c.l.b16 %v611
        %v732 = vunpack.c.h.b16 %v611
        %v733 = vunpack.c.l.b16 %v612
        %v734 = vunpack.c.h.b16 %v612
        %v735 = vunpack.c.l.b16 %v613
        %v736 = vunpack.c.h.b16 %v613
        %v737 = vunpack.c.l.b16 %v614
        %v738 = vunpack.c.h.b16 %v614
        %v739 = vunpack.c.l.b16 %v615
        %v740 = vunpack.c.h.b16 %v615
        %v741 = vunpack.c.l.b16 %v616
        %v742 = vunpack.c.h.b16 %v616
        %v743 = vunpack.c.l.b16 %v617
        %v744 = vunpack.c.h.b16 %v617
        %v745 = vunpack.c.l.b16 %v618
        %v746 = vunpack.c.h.b16 %v618
        %v747 = vunpack.c.l.b16 %v619
        %v748 = vunpack.c.h.b16 %v619
        %v749 = vunpack.c.l.b16 %v620
        %v750 = vunpack.c.h.b16 %v620
        %v751 = vunpack.c.l.b16 %v621
        %v752 = vunpack.c.h.b16 %v621
        %v753 = vunpack.c.l.b16 %v622
        %v754 = vunpack.c.h.b16 %v622
        %v755 = vunpack.c.l.b16 %v623
        %v756 = vunpack.c.h.b16 %v623
        %v757 = vunpack.c.l.b16 %v624
        %v758 = vunpack.c.h.b16 %v624
        %v759 = vunpack.c.l.b16 %v625
        %v760 = vunpack.c.h.b16 %v625
        %v761 = vpack.c.b16 %v699, %v697
        %v762 = vpack.c.b16 %v700, %v698
        %v763 = vpack.c.b16 %v703, %v701
        %v764 = vpack.c.b16 %v704, %v702
        %v765 = vpack.c.b16 %v707, %v705
        %v766 = vpack.c.b16 %v708, %v706
        %v767 = vpack.c.b16 %v711, %v709
        %v768 = vpack.c.b16 %v712, %v710
        %v769 = vpack.c.b16 %v715, %v713
        %v770 = vpack.c.b16 %v716, %v714
        %v771 = vpack.c.b16 %v719, %v717
        %v772 = vpack.c.b16 %v720, %v718
        %v773 = vpack.c.b16 %v723, %v721
        %v774 = vpack.c.b16 %v724, %v722
        %v775 = vpack.c.b16 %v727, %v725
        %v776 = vpack.c.b16 %v728, %v726
        %v777 = vpack.c.b16 %v731, %v729
        %v778 = vpack.c.b16 %v732, %v730
        %v779 = vpack.c.b16 %v735, %v733
        %v780 = vpack.c.b16 %v736, %v734
        %v781 = vpack.c.b16 %v739, %v737
        %v782 = vpack.c.b16 %v740, %v738
        %v783 = vpack.c.b16 %v743, %v741
        %v784 = vpack.c.b16 %v744, %v742
        %v785 = vpack.c.b16 %v747, %v745
        %v786 = vpack.c.b16 %v748, %v746
        %v787 = vpack.c.b16 %v751, %v749
        %v788 = vpack.c.b16 %v752, %v750
        %v789 = vpack.c.b16 %v755, %v753
        %v790 = vpack.c.b16 %v756, %v754
        %v791 = vpack.c.b16 %v759, %v757
        %v792 = vpack.c.b16 %v760, %v758
        %v857 = vunpack.c.l.b16 %v626
        %v858 = vunpack.c.l.b16 %v627
        %v859 = vunpack.c.l.b16 %v628
        %v860 = vunpack.c.l.b16 %v629
        %v861 = vunpack.c.l.b16 %v630
        %v862 = vunpack.c.l.b16 %v631
        %v863 = vunpack.c.l.b16 %v632
        %v864 = vunpack.c.l.b16 %v633
        %v865 = vunpack.c.l.b16 %v634
        %v866 = vunpack.c.l.b16 %v635
        %v867 = vunpack.c.l.b16 %v636
        %v868 = vunpack.c.l.b16 %v637
        %v869 = vunpack.c.l.b16 %v638
        %v870 = vunpack.c.l.b16 %v639
        %v871 = vunpack.c.l.b16 %v640
        %v872 = vunpack.c.l.b16 %v641
        %v873 = vunpack.c.l.b16 %v642
        %v874 = vunpack.c.l.b16 %v643
        %v875 = vunpack.c.l.b16 %v644
        %v876 = vunpack.c.l.b16 %v645
        %v877 = vunpack.c.l.b16 %v646
        %v878 = vunpack.c.l.b16 %v647
        %v879 = vunpack.c.l.b16 %v648
        %v880 = vunpack.c.l.b16 %v649
        %v881 = vunpack.c.l.b16 %v650
        %v882 = vunpack.c.l.b16 %v651
        %v883 = vunpack.c.l.b16 %v652
        %v884 = vunpack.c.l.b16 %v653
        %v885 = vunpack.c.l.b16 %v654
        %v886 = vunpack.c.l.b16 %v655
        %v887 = vunpack.c.l.b16 %v656
        %v888 = vunpack.c.l.b16 %v657
        %v889 = vpack.c.b16 %v858, %v857
        %v890 = vpack.c.b16 %v860, %v859
        %v891 = vpack.c.b16 %v862, %v861
        %v892 = vpack.c.b16 %v864, %v863
        %v893 = vpack.c.b16 %v866, %v865
        %v894 = vpack.c.b16 %v868, %v867
        %v895 = vpack.c.b16 %v870, %v869
        %v896 = vpack.c.b16 %v872, %v871
        %v897 = vpack.c.b16 %v874, %v873
        %v898 = vpack.c.b16 %v876, %v875
        %v899 = vpack.c.b16 %v878, %v877
        %v900 = vpack.c.b16 %v880, %v879
        %v901 = vpack.c.b16 %v882, %v881
        %v902 = vpack.c.b16 %v884, %v883
        %v903 = vpack.c.b16 %v886, %v885
        %v904 = vpack.c.b16 %v888, %v887
        %921 = vmatprep.subr.bf16.mxu0 0
        %922 = vmatpush1.bf16.msra.mxu0 %v889
        %923 = vmatprep.subr.bf16.mxu0 0
        %924 = vmatpush1.bf16.msra.mxu0 %v890
        %925 = vmatprep.subr.bf16.mxu0 0
        %926 = vmatpush1.bf16.msra.mxu0 %v891
        %927 = vmatprep.subr.bf16.mxu0 0
        %928 = vmatpush1.bf16.msra.mxu0 %v892
        %929 = vmatprep.subr.bf16.mxu0 0
        %930 = vmatpush1.bf16.msra.mxu0 %v893
        %931 = vmatprep.subr.bf16.mxu0 0
        %932 = vmatpush1.bf16.msra.mxu0 %v894
        %933 = vmatprep.subr.bf16.mxu0 0
        %934 = vmatpush1.bf16.msra.mxu0 %v895
        %935 = vmatprep.subr.bf16.mxu0 0
        %936 = vmatpush1.bf16.msra.mxu0 %v896
        %937 = vmatprep.subr.bf16.mxu0 0
        %938 = vmatpush1.bf16.msra.mxu0 %v897
        %939 = vmatprep.subr.bf16.mxu0 0
        %940 = vmatpush1.bf16.msra.mxu0 %v898
        %941 = vmatprep.subr.bf16.mxu0 0
        %942 = vmatpush1.bf16.msra.mxu0 %v899
        %943 = vmatprep.subr.bf16.mxu0 0
        %944 = vmatpush1.bf16.msra.mxu0 %v900
        %945 = vmatprep.subr.bf16.mxu0 0
        %946 = vmatpush1.bf16.msra.mxu0 %v901
        %947 = vmatprep.subr.bf16.mxu0 0
        %948 = vmatpush1.bf16.msra.mxu0 %v902
        %949 = vmatprep.subr.bf16.mxu0 0
        %950 = vmatpush1.bf16.msra.mxu0 %v903
        %951 = vmatprep.subr.bf16.mxu0 0
        %952 = vmatpush1.bf16.msra.mxu0 %v904
        %953 = vmatprep.mubr.bf16.mxu0 %v762
        %954 = vmatmul.mubr.bf16.gmra.mrb[0].mxu0 %v761
        %v955 = vpop.f32.mrb[0].mxu0
        %v956 = vadd.f32 %v663, %v955
        %v957 = vpop.f32.mrb[0].mxu0
        %v958 = vpop.f32.mrb[0].mxu0
        %v959 = vadd.f32 %v663, %v958
        %v960 = vpop.f32.mrb[0].mxu0
        %961 = vmatprep.mubr.bf16.mxu0 %v764
        %962 = vmatmul.mubr.bf16.gmra.mrb[0].mxu0 %v763
        %v963 = vpop.f32.mrb[0].mxu0
        %v964 = vadd.f32 %v663, %v963
        %v965 = vpop.f32.mrb[0].mxu0
        %v966 = vpop.f32.mrb[0].mxu0
        %v967 = vadd.f32 %v663, %v966
        %v968 = vpop.f32.mrb[0].mxu0
        %969 = vmatprep.mubr.bf16.mxu0 %v766
        %970 = vmatmul.mubr.bf16.gmra.mrb[0].mxu0 %v765
        %v971 = vpop.f32.mrb[0].mxu0
        %v972 = vadd.f32 %v663, %v971
        %v973 = vpop.f32.mrb[0].mxu0
        %v974 = vpop.f32.mrb[0].mxu0
        %v975 = vadd.f32 %v663, %v974
        %v976 = vpop.f32.mrb[0].mxu0
        %977 = vmatprep.mubr.bf16.mxu0 %v768
        %978 = vmatmul.mubr.bf16.gmra.mrb[0].mxu0 %v767
        %v979 = vpop.f32.mrb[0].mxu0
        %v980 = vadd.f32 %v663, %v979
        %v981 = vpop.f32.mrb[0].mxu0
        %v982 = vpop.f32.mrb[0].mxu0
        %v983 = vadd.f32 %v663, %v982
        %v984 = vpop.f32.mrb[0].mxu0
        %985 = vmatprep.mubr.bf16.mxu0 %v770
        %986 = vmatmul.mubr.bf16.gmra.mrb[0].mxu0 %v769
        %v987 = vpop.f32.mrb[0].mxu0
        %v988 = vadd.f32 %v663, %v987
        %v989 = vpop.f32.mrb[0].mxu0
        %v990 = vpop.f32.mrb[0].mxu0
        %v991 = vadd.f32 %v663, %v990
        %v992 = vpop.f32.mrb[0].mxu0
        %993 = vmatprep.mubr.bf16.mxu0 %v772
        %994 = vmatmul.mubr.bf16.gmra.mrb[0].mxu0 %v771
        %v995 = vpop.f32.mrb[0].mxu0
        %v996 = vadd.f32 %v663, %v995
        %v997 = vpop.f32.mrb[0].mxu0
        %v998 = vpop.f32.mrb[0].mxu0
        %v999 = vadd.f32 %v663, %v998
        %v1000 = vpop.f32.mrb[0].mxu0
        %1001 = vmatprep.mubr.bf16.mxu0 %v774
        %1002 = vmatmul.mubr.bf16.gmra.mrb[0].mxu0 %v773
        %v1003 = vpop.f32.mrb[0].mxu0
        %v1004 = vadd.f32 %v663, %v1003
        %v1005 = vpop.f32.mrb[0].mxu0
        %v1006 = vpop.f32.mrb[0].mxu0
        %v1007 = vadd.f32 %v663, %v1006
        %v1008 = vpop.f32.mrb[0].mxu0
        %1009 = vmatprep.mubr.bf16.mxu0 %v776
        %1010 = vmatmul.mubr.bf16.gmra.mrb[0].mxu0 %v775
        %v1011 = vpop.f32.mrb[0].mxu0
        %v1012 = vadd.f32 %v663, %v1011
        %v1013 = vpop.f32.mrb[0].mxu0
        %v1014 = vpop.f32.mrb[0].mxu0
        %v1015 = vadd.f32 %v663, %v1014
        %v1016 = vpop.f32.mrb[0].mxu0
        %1017 = vmatprep.mubr.bf16.mxu0 %v778
        %1018 = vmatmul.mubr.bf16.gmra.mrb[0].mxu0 %v777
        %v1019 = vpop.f32.mrb[0].mxu0
        %v1020 = vadd.f32 %v663, %v1019
        %v1021 = vpop.f32.mrb[0].mxu0
        %v1022 = vpop.f32.mrb[0].mxu0
        %v1023 = vadd.f32 %v663, %v1022
        %v1024 = vpop.f32.mrb[0].mxu0
        %1025 = vmatprep.mubr.bf16.mxu0 %v780
        %1026 = vmatmul.mubr.bf16.gmra.mrb[0].mxu0 %v779
        %v1027 = vpop.f32.mrb[0].mxu0
        %v1028 = vadd.f32 %v663, %v1027
        %v1029 = vpop.f32.mrb[0].mxu0
        %v1030 = vpop.f32.mrb[0].mxu0
        %v1031 = vadd.f32 %v663, %v1030
        %v1032 = vpop.f32.mrb[0].mxu0
        %1033 = vmatprep.mubr.bf16.mxu0 %v782
        %1034 = vmatmul.mubr.bf16.gmra.mrb[0].mxu0 %v781
        %v1035 = vpop.f32.mrb[0].mxu0
        %v1036 = vadd.f32 %v663, %v1035
        %v1037 = vpop.f32.mrb[0].mxu0
        %v1038 = vpop.f32.mrb[0].mxu0
        %v1039 = vadd.f32 %v663, %v1038
        %v1040 = vpop.f32.mrb[0].mxu0
        %1041 = vmatprep.mubr.bf16.mxu0 %v784
        %1042 = vmatmul.mubr.bf16.gmra.mrb[0].mxu0 %v783
        %v1043 = vpop.f32.mrb[0].mxu0
        %v1044 = vadd.f32 %v663, %v1043
        %v1045 = vpop.f32.mrb[0].mxu0
        %v1046 = vpop.f32.mrb[0].mxu0
        %v1047 = vadd.f32 %v663, %v1046
        %v1048 = vpop.f32.mrb[0].mxu0
        %1049 = vmatprep.mubr.bf16.mxu0 %v786
        %1050 = vmatmul.mubr.bf16.gmra.mrb[0].mxu0 %v785
        %v1051 = vpop.f32.mrb[0].mxu0
        %v1052 = vadd.f32 %v663, %v1051
        %v1053 = vpop.f32.mrb[0].mxu0
        %v1054 = vpop.f32.mrb[0].mxu0
        %v1055 = vadd.f32 %v663, %v1054
        %v1056 = vpop.f32.mrb[0].mxu0
        %1057 = vmatprep.mubr.bf16.mxu0 %v788
        %1058 = vmatmul.mubr.bf16.gmra.mrb[0].mxu0 %v787
        %v1059 = vpop.f32.mrb[0].mxu0
        %v1060 = vadd.f32 %v663, %v1059
        %v1061 = vpop.f32.mrb[0].mxu0
        %v1062 = vpop.f32.mrb[0].mxu0
        %v1063 = vadd.f32 %v663, %v1062
        %v1064 = vpop.f32.mrb[0].mxu0
        %1065 = vmatprep.mubr.bf16.mxu0 %v790
        %1066 = vmatmul.mubr.bf16.gmra.mrb[0].mxu0 %v789
        %v1067 = vpop.f32.mrb[0].mxu0
        %v1068 = vadd.f32 %v663, %v1067
        %v1069 = vpop.f32.mrb[0].mxu0
        %v1070 = vpop.f32.mrb[0].mxu0
        %v1071 = vadd.f32 %v663, %v1070
        %v1072 = vpop.f32.mrb[0].mxu0
        %1073 = vmatprep.mubr.bf16.mxu0 %v792
        %1074 = vmatmul.mubr.bf16.gmra.mrb[0].mxu0 %v791
        %v1075 = vpop.f32.mrb[0].mxu0
        %v1076 = vadd.f32 %v663, %v1075
        %v1077 = vpop.f32.mrb[0].mxu0
        %v1078 = vpop.f32.mrb[0].mxu0
        %v1079 = vadd.f32 %v663, %v1078
        %v1080 = vpop.f32.mrb[0].mxu0
        %1081 = vdwg.mxu0
        %1114 = vrot.lane.b32.xlu0 %v956, 64
        %v1115 = vpop.permute.xlu0 %1114
        %1116 = vrot.lane.b32.xlu0 %v959, 64
        %v1117 = vpop.permute.xlu0 %1116
        %1118 = vrot.lane.b32.xlu0 %v964, 64
        %v1119 = vpop.permute.xlu0 %1118
        %1120 = vrot.lane.b32.xlu0 %v967, 64
        %v1121 = vpop.permute.xlu0 %1120
        %1122 = vrot.lane.b32.xlu0 %v972, 64
        %v1123 = vpop.permute.xlu0 %1122
        %1124 = vrot.lane.b32.xlu0 %v975, 64
        %v1125 = vpop.permute.xlu0 %1124
        %1126 = vrot.lane.b32.xlu0 %v980, 64
        %v1127 = vpop.permute.xlu0 %1126
        %1128 = vrot.lane.b32.xlu0 %v983, 64
        %v1129 = vpop.permute.xlu0 %1128
        %1130 = vrot.lane.b32.xlu0 %v988, 64
        %v1131 = vpop.permute.xlu0 %1130
        %1132 = vrot.lane.b32.xlu0 %v991, 64
        %v1133 = vpop.permute.xlu0 %1132
        %1134 = vrot.lane.b32.xlu0 %v996, 64
        %v1135 = vpop.permute.xlu0 %1134
        %1136 = vrot.lane.b32.xlu0 %v999, 64
        %v1137 = vpop.permute.xlu0 %1136
        %1138 = vrot.lane.b32.xlu0 %v1004, 64
        %v1139 = vpop.permute.xlu0 %1138
        %1140 = vrot.lane.b32.xlu0 %v1007, 64
        %v1141 = vpop.permute.xlu0 %1140
        %1142 = vrot.lane.b32.xlu0 %v1012, 64
        %v1143 = vpop.permute.xlu0 %1142
        %1144 = vrot.lane.b32.xlu0 %v1015, 64
        %v1145 = vpop.permute.xlu0 %1144
        %1146 = vrot.lane.b32.xlu0 %v1020, 64
        %v1147 = vpop.permute.xlu0 %1146
        %1148 = vrot.lane.b32.xlu0 %v1023, 64
        %v1149 = vpop.permute.xlu0 %1148
        %1150 = vrot.lane.b32.xlu0 %v1028, 64
        %v1151 = vpop.permute.xlu0 %1150
        %1152 = vrot.lane.b32.xlu0 %v1031, 64
        %v1153 = vpop.permute.xlu0 %1152
        %1154 = vrot.lane.b32.xlu0 %v1036, 64
        %v1155 = vpop.permute.xlu0 %1154
        %1156 = vrot.lane.b32.xlu0 %v1039, 64
        %v1157 = vpop.permute.xlu0 %1156
        %1158 = vrot.lane.b32.xlu0 %v1044, 64
        %v1159 = vpop.permute.xlu0 %1158
        %1160 = vrot.lane.b32.xlu0 %v1047, 64
        %v1161 = vpop.permute.xlu0 %1160
        %1162 = vrot.lane.b32.xlu0 %v1052, 64
        %v1163 = vpop.permute.xlu0 %1162
        %1164 = vrot.lane.b32.xlu0 %v1055, 64
        %v1165 = vpop.permute.xlu0 %1164
        %1166 = vrot.lane.b32.xlu0 %v1060, 64
        %v1167 = vpop.permute.xlu0 %1166
        %1168 = vrot.lane.b32.xlu0 %v1063, 64
        %v1169 = vpop.permute.xlu0 %1168
        %1170 = vrot.lane.b32.xlu0 %v1068, 64
        %v1171 = vpop.permute.xlu0 %1170
        %1172 = vrot.lane.b32.xlu0 %v1071, 64
        %v1173 = vpop.permute.xlu0 %1172
        %1174 = vrot.lane.b32.xlu0 %v1076, 64
        %v1175 = vpop.permute.xlu0 %1174
        %1176 = vrot.lane.b32.xlu0 %v1079, 64
        %v1177 = vpop.permute.xlu0 %1176
        %v1210 = vld [vmem:[#allocation10] sm:$0xff]
        %v1211 = vld [vmem:[#allocation10 + $0x8] sm:$0xff]
        %v1212 = vld [vmem:[#allocation10 + $0x10] sm:$0xff]
        %v1213 = vld [vmem:[#allocation10 + $0x18] sm:$0xff]
        %v1214 = vld [vmem:[#allocation10 + $0x20] sm:$0xff]
        %v1215 = vld [vmem:[#allocation10 + $0x28] sm:$0xff]
        %v1216 = vld [vmem:[#allocation10 + $0x30] sm:$0xff]
        %v1217 = vld [vmem:[#allocation10 + $0x38] sm:$0xff]
        %v1218 = vld [vmem:[#allocation10 + $0x40] sm:$0xff]
        %v1219 = vld [vmem:[#allocation10 + $0x48] sm:$0xff]
        %v1220 = vld [vmem:[#allocation10 + $0x50] sm:$0xff]
        %v1221 = vld [vmem:[#allocation10 + $0x58] sm:$0xff]
        %v1222 = vld [vmem:[#allocation10 + $0x60] sm:$0xff]
        %v1223 = vld [vmem:[#allocation10 + $0x68] sm:$0xff]
        %v1224 = vld [vmem:[#allocation10 + $0x70] sm:$0xff]
        %v1225 = vld [vmem:[#allocation10 + $0x78] sm:$0xff]
        %v1226 = vld [vmem:[#allocation10 + $0x80] sm:$0xff]
        %v1227 = vld [vmem:[#allocation10 + $0x88] sm:$0xff]
        %v1228 = vld [vmem:[#allocation10 + $0x90] sm:$0xff]
        %v1229 = vld [vmem:[#allocation10 + $0x98] sm:$0xff]
        %v1230 = vld [vmem:[#allocation10 + $0xa0] sm:$0xff]
        %v1231 = vld [vmem:[#allocation10 + $0xa8] sm:$0xff]
        %v1232 = vld [vmem:[#allocation10 + $0xb0] sm:$0xff]
        %v1233 = vld [vmem:[#allocation10 + $0xb8] sm:$0xff]
        %v1234 = vld [vmem:[#allocation10 + $0xc0] sm:$0xff]
        %v1235 = vld [vmem:[#allocation10 + $0xc8] sm:$0xff]
        %v1236 = vld [vmem:[#allocation10 + $0xd0] sm:$0xff]
        %v1237 = vld [vmem:[#allocation10 + $0xd8] sm:$0xff]
        %v1238 = vld [vmem:[#allocation10 + $0xe0] sm:$0xff]
        %v1239 = vld [vmem:[#allocation10 + $0xe8] sm:$0xff]
        %v1240 = vld [vmem:[#allocation10 + $0xf0] sm:$0xff]
        %v1241 = vld [vmem:[#allocation10 + $0xf8] sm:$0xff]
        %v1242 = vmul.f32 %v956, %v1210
        %v1243 = vmul.f32 %v959, %v1211
        %v1244 = vmul.f32 %v964, %v1212
        %v1245 = vmul.f32 %v967, %v1213
        %v1246 = vmul.f32 %v972, %v1214
        %v1247 = vmul.f32 %v975, %v1215
        %v1248 = vmul.f32 %v980, %v1216
        %v1249 = vmul.f32 %v983, %v1217
        %v1250 = vmul.f32 %v988, %v1218
        %v1251 = vmul.f32 %v991, %v1219
        %v1252 = vmul.f32 %v996, %v1220
        %v1253 = vmul.f32 %v999, %v1221
        %v1254 = vmul.f32 %v1004, %v1222
        %v1255 = vmul.f32 %v1007, %v1223
        %v1256 = vmul.f32 %v1012, %v1224
        %v1257 = vmul.f32 %v1015, %v1225
        %v1258 = vmul.f32 %v1020, %v1226
        %v1259 = vmul.f32 %v1023, %v1227
        %v1260 = vmul.f32 %v1028, %v1228
        %v1261 = vmul.f32 %v1031, %v1229
        %v1262 = vmul.f32 %v1036, %v1230
        %v1263 = vmul.f32 %v1039, %v1231
        %v1264 = vmul.f32 %v1044, %v1232
        %v1265 = vmul.f32 %v1047, %v1233
        %v1266 = vmul.f32 %v1052, %v1234
        %v1267 = vmul.f32 %v1055, %v1235
        %v1268 = vmul.f32 %v1060, %v1236
        %v1269 = vmul.f32 %v1063, %v1237
        %v1270 = vmul.f32 %v1068, %v1238
        %v1271 = vmul.f32 %v1071, %v1239
        %v1272 = vmul.f32 %v1076, %v1240
        %v1273 = vmul.f32 %v1079, %v1241
        %v1274 = vld [vmem:[#allocation11] sm:$0xff]
        %v1275 = vld [vmem:[#allocation11 + $0x8] sm:$0xff]
        %v1276 = vld [vmem:[#allocation11 + $0x10] sm:$0xff]
        %v1277 = vld [vmem:[#allocation11 + $0x18] sm:$0xff]
        %v1278 = vld [vmem:[#allocation11 + $0x20] sm:$0xff]
        %v1279 = vld [vmem:[#allocation11 + $0x28] sm:$0xff]
        %v1280 = vld [vmem:[#allocation11 + $0x30] sm:$0xff]
        %v1281 = vld [vmem:[#allocation11 + $0x38] sm:$0xff]
        %v1282 = vld [vmem:[#allocation11 + $0x40] sm:$0xff]
        %v1283 = vld [vmem:[#allocation11 + $0x48] sm:$0xff]
        %v1284 = vld [vmem:[#allocation11 + $0x50] sm:$0xff]
        %v1285 = vld [vmem:[#allocation11 + $0x58] sm:$0xff]
        %v1286 = vld [vmem:[#allocation11 + $0x60] sm:$0xff]
        %v1287 = vld [vmem:[#allocation11 + $0x68] sm:$0xff]
        %v1288 = vld [vmem:[#allocation11 + $0x70] sm:$0xff]
        %v1289 = vld [vmem:[#allocation11 + $0x78] sm:$0xff]
        %v1290 = vld [vmem:[#allocation11 + $0x80] sm:$0xff]
        %v1291 = vld [vmem:[#allocation11 + $0x88] sm:$0xff]
        %v1292 = vld [vmem:[#allocation11 + $0x90] sm:$0xff]
        %v1293 = vld [vmem:[#allocation11 + $0x98] sm:$0xff]
        %v1294 = vld [vmem:[#allocation11 + $0xa0] sm:$0xff]
        %v1295 = vld [vmem:[#allocation11 + $0xa8] sm:$0xff]
        %v1296 = vld [vmem:[#allocation11 + $0xb0] sm:$0xff]
        %v1297 = vld [vmem:[#allocation11 + $0xb8] sm:$0xff]
        %v1298 = vld [vmem:[#allocation11 + $0xc0] sm:$0xff]
        %v1299 = vld [vmem:[#allocation11 + $0xc8] sm:$0xff]
        %v1300 = vld [vmem:[#allocation11 + $0xd0] sm:$0xff]
        %v1301 = vld [vmem:[#allocation11 + $0xd8] sm:$0xff]
        %v1302 = vld [vmem:[#allocation11 + $0xe0] sm:$0xff]
        %v1303 = vld [vmem:[#allocation11 + $0xe8] sm:$0xff]
        %v1304 = vld [vmem:[#allocation11 + $0xf0] sm:$0xff]
        %v1305 = vld [vmem:[#allocation11 + $0xf8] sm:$0xff]
        %v1306 = vmul.f32 %v1115, %v1274
        %v1307 = vmul.f32 %v1117, %v1275
        %v1308 = vmul.f32 %v1119, %v1276
        %v1309 = vmul.f32 %v1121, %v1277
        %v1310 = vmul.f32 %v1123, %v1278
        %v1311 = vmul.f32 %v1125, %v1279
        %v1312 = vmul.f32 %v1127, %v1280
        %v1313 = vmul.f32 %v1129, %v1281
        %v1314 = vmul.f32 %v1131, %v1282
        %v1315 = vmul.f32 %v1133, %v1283
        %v1316 = vmul.f32 %v1135, %v1284
        %v1317 = vmul.f32 %v1137, %v1285
        %v1318 = vmul.f32 %v1139, %v1286
        %v1319 = vmul.f32 %v1141, %v1287
        %v1320 = vmul.f32 %v1143, %v1288
        %v1321 = vmul.f32 %v1145, %v1289
        %v1322 = vmul.f32 %v1147, %v1290
        %v1323 = vmul.f32 %v1149, %v1291
        %v1324 = vmul.f32 %v1151, %v1292
        %v1325 = vmul.f32 %v1153, %v1293
        %v1326 = vmul.f32 %v1155, %v1294
        %v1327 = vmul.f32 %v1157, %v1295
        %v1328 = vmul.f32 %v1159, %v1296
        %v1329 = vmul.f32 %v1161, %v1297
        %v1330 = vmul.f32 %v1163, %v1298
        %v1331 = vmul.f32 %v1165, %v1299
        %v1332 = vmul.f32 %v1167, %v1300
        %v1333 = vmul.f32 %v1169, %v1301
        %v1334 = vmul.f32 %v1171, %v1302
        %v1335 = vmul.f32 %v1173, %v1303
        %v1336 = vmul.f32 %v1175, %v1304
        %v1337 = vmul.f32 %v1177, %v1305
        %v1338 = vadd.f32 %v1242, %v1306
        %v1339 = vadd.f32 %v1243, %v1307
        %v1340 = vadd.f32 %v1244, %v1308
        %v1341 = vadd.f32 %v1245, %v1309
        %v1342 = vadd.f32 %v1246, %v1310
        %v1343 = vadd.f32 %v1247, %v1311
        %v1344 = vadd.f32 %v1248, %v1312
        %v1345 = vadd.f32 %v1249, %v1313
        %v1346 = vadd.f32 %v1250, %v1314
        %v1347 = vadd.f32 %v1251, %v1315
        %v1348 = vadd.f32 %v1252, %v1316
        %v1349 = vadd.f32 %v1253, %v1317
        %v1350 = vadd.f32 %v1254, %v1318
        %v1351 = vadd.f32 %v1255, %v1319
        %v1352 = vadd.f32 %v1256, %v1320
        %v1353 = vadd.f32 %v1257, %v1321
        %v1354 = vadd.f32 %v1258, %v1322
        %v1355 = vadd.f32 %v1259, %v1323
        %v1356 = vadd.f32 %v1260, %v1324
        %v1357 = vadd.f32 %v1261, %v1325
        %v1358 = vadd.f32 %v1262, %v1326
        %v1359 = vadd.f32 %v1263, %v1327
        %v1360 = vadd.f32 %v1264, %v1328
        %v1361 = vadd.f32 %v1265, %v1329
        %v1362 = vadd.f32 %v1266, %v1330
        %v1363 = vadd.f32 %v1267, %v1331
        %v1364 = vadd.f32 %v1268, %v1332
        %v1365 = vadd.f32 %v1269, %v1333
        %v1366 = vadd.f32 %v1270, %v1334
        %v1367 = vadd.f32 %v1271, %v1335
        %v1368 = vadd.f32 %v1272, %v1336
        %v1369 = vadd.f32 %v1273, %v1337
        %v1370 = vld [vmem:[%s494] sm:$0xff]
        %v1371 = vld [vmem:[%s494 + $0x8] sm:$0xff]
        %v1372 = vld [vmem:[%s494 + $0x10] sm:$0xff]
        %v1373 = vld [vmem:[%s494 + $0x18] sm:$0xff]
        %v1374 = vld [vmem:[%s494 + $0x20] sm:$0xff]
        %v1375 = vld [vmem:[%s494 + $0x28] sm:$0xff]
        %v1376 = vld [vmem:[%s494 + $0x30] sm:$0xff]
        %v1377 = vld [vmem:[%s494 + $0x38] sm:$0xff]
        %v1378 = vld [vmem:[%s494 + $0x40] sm:$0xff]
        %v1379 = vld [vmem:[%s494 + $0x48] sm:$0xff]
        %v1380 = vld [vmem:[%s494 + $0x50] sm:$0xff]
        %v1381 = vld [vmem:[%s494 + $0x58] sm:$0xff]
        %v1382 = vld [vmem:[%s494 + $0x60] sm:$0xff]
        %v1383 = vld [vmem:[%s494 + $0x68] sm:$0xff]
        %v1384 = vld [vmem:[%s494 + $0x70] sm:$0xff]
        %v1385 = vld [vmem:[%s494 + $0x78] sm:$0xff]
        %v1386 = vld [vmem:[%s494 + $0x80] sm:$0xff]
        %v1387 = vld [vmem:[%s494 + $0x88] sm:$0xff]
        %v1388 = vld [vmem:[%s494 + $0x90] sm:$0xff]
        %v1389 = vld [vmem:[%s494 + $0x98] sm:$0xff]
        %v1390 = vld [vmem:[%s494 + $0xa0] sm:$0xff]
        %v1391 = vld [vmem:[%s494 + $0xa8] sm:$0xff]
        %v1392 = vld [vmem:[%s494 + $0xb0] sm:$0xff]
        %v1393 = vld [vmem:[%s494 + $0xb8] sm:$0xff]
        %v1394 = vld [vmem:[%s494 + $0xc0] sm:$0xff]
        %v1395 = vld [vmem:[%s494 + $0xc8] sm:$0xff]
        %v1396 = vld [vmem:[%s494 + $0xd0] sm:$0xff]
        %v1397 = vld [vmem:[%s494 + $0xd8] sm:$0xff]
        %v1398 = vld [vmem:[%s494 + $0xe0] sm:$0xff]
        %v1399 = vld [vmem:[%s494 + $0xe8] sm:$0xff]
        %v1400 = vld [vmem:[%s494 + $0xf0] sm:$0xff]
        %v1401 = vld [vmem:[%s494 + $0xf8] sm:$0xff]
        %v1402 = vld [vmem:[%s512] sm:$0xf]
        %v1403 = vld [vmem:[%s512 + $0x4] sm:$0xf]
        %v1404 = vld [vmem:[%s512 + $0x8] sm:$0xf]
        %v1405 = vld [vmem:[%s512 + $0xc] sm:$0xf]
        %v1406 = vld [vmem:[%s512 + $0x10] sm:$0xf]
        %v1407 = vld [vmem:[%s512 + $0x14] sm:$0xf]
        %v1408 = vld [vmem:[%s512 + $0x18] sm:$0xf]
        %v1409 = vld [vmem:[%s512 + $0x1c] sm:$0xf]
        %v1410 = vld [vmem:[%s512 + $0x20] sm:$0xf]
        %v1411 = vld [vmem:[%s512 + $0x24] sm:$0xf]
        %v1412 = vld [vmem:[%s512 + $0x28] sm:$0xf]
        %v1413 = vld [vmem:[%s512 + $0x2c] sm:$0xf]
        %v1414 = vld [vmem:[%s512 + $0x30] sm:$0xf]
        %v1415 = vld [vmem:[%s512 + $0x34] sm:$0xf]
        %v1416 = vld [vmem:[%s512 + $0x38] sm:$0xf]
        %v1417 = vld [vmem:[%s512 + $0x3c] sm:$0xf]
        %v1418 = vld [vmem:[%s512 + $0x40] sm:$0xf]
        %v1419 = vld [vmem:[%s512 + $0x44] sm:$0xf]
        %v1420 = vld [vmem:[%s512 + $0x48] sm:$0xf]
        %v1421 = vld [vmem:[%s512 + $0x4c] sm:$0xf]
        %v1422 = vld [vmem:[%s512 + $0x50] sm:$0xf]
        %v1423 = vld [vmem:[%s512 + $0x54] sm:$0xf]
        %v1424 = vld [vmem:[%s512 + $0x58] sm:$0xf]
        %v1425 = vld [vmem:[%s512 + $0x5c] sm:$0xf]
        %v1426 = vld [vmem:[%s512 + $0x60] sm:$0xf]
        %v1427 = vld [vmem:[%s512 + $0x64] sm:$0xf]
        %v1428 = vld [vmem:[%s512 + $0x68] sm:$0xf]
        %v1429 = vld [vmem:[%s512 + $0x6c] sm:$0xf]
        %v1430 = vld [vmem:[%s512 + $0x70] sm:$0xf]
        %v1431 = vld [vmem:[%s512 + $0x74] sm:$0xf]
        %v1432 = vld [vmem:[%s512 + $0x78] sm:$0xf]
        %v1433 = vld [vmem:[%s512 + $0x7c] sm:$0xf]
        %v1434 = vld [vmem:[%s588] sm:$0x1]
        %v1436 = vlaneseq
        %v1437 = vshrl.u32 %v1436, 7
        %v1438 = vsub.s32 0, %v1437
        %v1439 = vrot.slane %v1434, %v1438
        %v1473 = vunpack.c.l.b16 %v1370
        %v1474 = vunpack.c.h.b16 %v1370
        %v1475 = vunpack.c.l.b16 %v1371
        %v1476 = vunpack.c.h.b16 %v1371
        %v1477 = vunpack.c.l.b16 %v1372
        %v1478 = vunpack.c.h.b16 %v1372
        %v1479 = vunpack.c.l.b16 %v1373
        %v1480 = vunpack.c.h.b16 %v1373
        %v1481 = vunpack.c.l.b16 %v1374
        %v1482 = vunpack.c.h.b16 %v1374
        %v1483 = vunpack.c.l.b16 %v1375
        %v1484 = vunpack.c.h.b16 %v1375
        %v1485 = vunpack.c.l.b16 %v1376
        %v1486 = vunpack.c.h.b16 %v1376
        %v1487 = vunpack.c.l.b16 %v1377
        %v1488 = vunpack.c.h.b16 %v1377
        %v1489 = vunpack.c.l.b16 %v1378
        %v1490 = vunpack.c.h.b16 %v1378
        %v1491 = vunpack.c.l.b16 %v1379
        %v1492 = vunpack.c.h.b16 %v1379
        %v1493 = vunpack.c.l.b16 %v1380
        %v1494 = vunpack.c.h.b16 %v1380
        %v1495 = vunpack.c.l.b16 %v1381
        %v1496 = vunpack.c.h.b16 %v1381
        %v1497 = vunpack.c.l.b16 %v1382
        %v1498 = vunpack.c.h.b16 %v1382
        %v1499 = vunpack.c.l.b16 %v1383
        %v1500 = vunpack.c.h.b16 %v1383
        %v1501 = vunpack.c.l.b16 %v1384
        %v1502 = vunpack.c.h.b16 %v1384
        %v1503 = vunpack.c.l.b16 %v1385
        %v1504 = vunpack.c.h.b16 %v1385
        %v1505 = vunpack.c.l.b16 %v1386
        %v1506 = vunpack.c.h.b16 %v1386
        %v1507 = vunpack.c.l.b16 %v1387
        %v1508 = vunpack.c.h.b16 %v1387
        %v1509 = vunpack.c.l.b16 %v1388
        %v1510 = vunpack.c.h.b16 %v1388
        %v1511 = vunpack.c.l.b16 %v1389
        %v1512 = vunpack.c.h.b16 %v1389
        %v1513 = vunpack.c.l.b16 %v1390
        %v1514 = vunpack.c.h.b16 %v1390
        %v1515 = vunpack.c.l.b16 %v1391
        %v1516 = vunpack.c.h.b16 %v1391
        %v1517 = vunpack.c.l.b16 %v1392
        %v1518 = vunpack.c.h.b16 %v1392
        %v1519 = vunpack.c.l.b16 %v1393
        %v1520 = vunpack.c.h.b16 %v1393
        %v1521 = vunpack.c.l.b16 %v1394
        %v1522 = vunpack.c.h.b16 %v1394
        %v1523 = vunpack.c.l.b16 %v1395
        %v1524 = vunpack.c.h.b16 %v1395
        %v1525 = vunpack.c.l.b16 %v1396
        %v1526 = vunpack.c.h.b16 %v1396
        %v1527 = vunpack.c.l.b16 %v1397
        %v1528 = vunpack.c.h.b16 %v1397
        %v1529 = vunpack.c.l.b16 %v1398
        %v1530 = vunpack.c.h.b16 %v1398
        %v1531 = vunpack.c.l.b16 %v1399
        %v1532 = vunpack.c.h.b16 %v1399
        %v1533 = vunpack.c.l.b16 %v1400
        %v1534 = vunpack.c.h.b16 %v1400
        %v1535 = vunpack.c.l.b16 %v1401
        %v1536 = vunpack.c.h.b16 %v1401
        %v1537 = vpack.c.b16 %v1475, %v1473
        %v1538 = vpack.c.b16 %v1476, %v1474
        %v1539 = vpack.c.b16 %v1479, %v1477
        %v1540 = vpack.c.b16 %v1480, %v1478
        %v1541 = vpack.c.b16 %v1483, %v1481
        %v1542 = vpack.c.b16 %v1484, %v1482
        %v1543 = vpack.c.b16 %v1487, %v1485
        %v1544 = vpack.c.b16 %v1488, %v1486
        %v1545 = vpack.c.b16 %v1491, %v1489
        %v1546 = vpack.c.b16 %v1492, %v1490
        %v1547 = vpack.c.b16 %v1495, %v1493
        %v1548 = vpack.c.b16 %v1496, %v1494
        %v1549 = vpack.c.b16 %v1499, %v1497
        %v1550 = vpack.c.b16 %v1500, %v1498
        %v1551 = vpack.c.b16 %v1503, %v1501
        %v1552 = vpack.c.b16 %v1504, %v1502
        %v1553 = vpack.c.b16 %v1507, %v1505
        %v1554 = vpack.c.b16 %v1508, %v1506
        %v1555 = vpack.c.b16 %v1511, %v1509
        %v1556 = vpack.c.b16 %v1512, %v1510
        %v1557 = vpack.c.b16 %v1515, %v1513
        %v1558 = vpack.c.b16 %v1516, %v1514
        %v1559 = vpack.c.b16 %v1519, %v1517
        %v1560 = vpack.c.b16 %v1520, %v1518
        %v1561 = vpack.c.b16 %v1523, %v1521
        %v1562 = vpack.c.b16 %v1524, %v1522
        %v1563 = vpack.c.b16 %v1527, %v1525
        %v1564 = vpack.c.b16 %v1528, %v1526
        %v1565 = vpack.c.b16 %v1531, %v1529
        %v1566 = vpack.c.b16 %v1532, %v1530
        %v1567 = vpack.c.b16 %v1535, %v1533
        %v1568 = vpack.c.b16 %v1536, %v1534
        %v1633 = vunpack.c.l.b16 %v1402
        %v1634 = vunpack.c.l.b16 %v1403
        %v1635 = vunpack.c.l.b16 %v1404
        %v1636 = vunpack.c.l.b16 %v1405
        %v1637 = vunpack.c.l.b16 %v1406
        %v1638 = vunpack.c.l.b16 %v1407
        %v1639 = vunpack.c.l.b16 %v1408
        %v1640 = vunpack.c.l.b16 %v1409
        %v1641 = vunpack.c.l.b16 %v1410
        %v1642 = vunpack.c.l.b16 %v1411
        %v1643 = vunpack.c.l.b16 %v1412
        %v1644 = vunpack.c.l.b16 %v1413
        %v1645 = vunpack.c.l.b16 %v1414
        %v1646 = vunpack.c.l.b16 %v1415
        %v1647 = vunpack.c.l.b16 %v1416
        %v1648 = vunpack.c.l.b16 %v1417
        %v1649 = vunpack.c.l.b16 %v1418
        %v1650 = vunpack.c.l.b16 %v1419
        %v1651 = vunpack.c.l.b16 %v1420
        %v1652 = vunpack.c.l.b16 %v1421
        %v1653 = vunpack.c.l.b16 %v1422
        %v1654 = vunpack.c.l.b16 %v1423
        %v1655 = vunpack.c.l.b16 %v1424
        %v1656 = vunpack.c.l.b16 %v1425
        %v1657 = vunpack.c.l.b16 %v1426
        %v1658 = vunpack.c.l.b16 %v1427
        %v1659 = vunpack.c.l.b16 %v1428
        %v1660 = vunpack.c.l.b16 %v1429
        %v1661 = vunpack.c.l.b16 %v1430
        %v1662 = vunpack.c.l.b16 %v1431
        %v1663 = vunpack.c.l.b16 %v1432
        %v1664 = vunpack.c.l.b16 %v1433
        %v1665 = vpack.c.b16 %v1634, %v1633
        %v1666 = vpack.c.b16 %v1636, %v1635
        %v1667 = vpack.c.b16 %v1638, %v1637
        %v1668 = vpack.c.b16 %v1640, %v1639
        %v1669 = vpack.c.b16 %v1642, %v1641
        %v1670 = vpack.c.b16 %v1644, %v1643
        %v1671 = vpack.c.b16 %v1646, %v1645
        %v1672 = vpack.c.b16 %v1648, %v1647
        %v1673 = vpack.c.b16 %v1650, %v1649
        %v1674 = vpack.c.b16 %v1652, %v1651
        %v1675 = vpack.c.b16 %v1654, %v1653
        %v1676 = vpack.c.b16 %v1656, %v1655
        %v1677 = vpack.c.b16 %v1658, %v1657
        %v1678 = vpack.c.b16 %v1660, %v1659
        %v1679 = vpack.c.b16 %v1662, %v1661
        %v1680 = vpack.c.b16 %v1664, %v1663
        %1697 = vmatprep.subr.bf16.mxu0 0
        %1698 = vmatpush1.bf16.msra.mxu0 %v1665
        %1699 = vmatprep.subr.bf16.mxu0 0
        %1700 = vmatpush1.bf16.msra.mxu0 %v1666
        %1701 = vmatprep.subr.bf16.mxu0 0
        %1702 = vmatpush1.bf16.msra.mxu0 %v1667
        %1703 = vmatprep.subr.bf16.mxu0 0
        %1704 = vmatpush1.bf16.msra.mxu0 %v1668
        %1705 = vmatprep.subr.bf16.mxu0 0
        %1706 = vmatpush1.bf16.msra.mxu0 %v1669
        %1707 = vmatprep.subr.bf16.mxu0 0
        %1708 = vmatpush1.bf16.msra.mxu0 %v1670
        %1709 = vmatprep.subr.bf16.mxu0 0
        %1710 = vmatpush1.bf16.msra.mxu0 %v1671
        %1711 = vmatprep.subr.bf16.mxu0 0
        %1712 = vmatpush1.bf16.msra.mxu0 %v1672
        %1713 = vmatprep.subr.bf16.mxu0 0
        %1714 = vmatpush1.bf16.msra.mxu0 %v1673
        %1715 = vmatprep.subr.bf16.mxu0 0
        %1716 = vmatpush1.bf16.msra.mxu0 %v1674
        %1717 = vmatprep.subr.bf16.mxu0 0
        %1718 = vmatpush1.bf16.msra.mxu0 %v1675
        %1719 = vmatprep.subr.bf16.mxu0 0
        %1720 = vmatpush1.bf16.msra.mxu0 %v1676
        %1721 = vmatprep.subr.bf16.mxu0 0
        %1722 = vmatpush1.bf16.msra.mxu0 %v1677
        %1723 = vmatprep.subr.bf16.mxu0 0
        %1724 = vmatpush1.bf16.msra.mxu0 %v1678
        %1725 = vmatprep.subr.bf16.mxu0 0
        %1726 = vmatpush1.bf16.msra.mxu0 %v1679
        %1727 = vmatprep.subr.bf16.mxu0 0
        %1728 = vmatpush1.bf16.msra.mxu0 %v1680
        %1729 = vmatprep.mubr.bf16.mxu0 %v1538
        %1730 = vmatmul.mubr.bf16.gmra.mrb[0].mxu0 %v1537
        %v1731 = vpop.f32.mrb[0].mxu0
        %v1732 = vadd.f32 %v1439, %v1731
        %v1733 = vpop.f32.mrb[0].mxu0
        %v1734 = vpop.f32.mrb[0].mxu0
        %v1735 = vadd.f32 %v1439, %v1734
        %v1736 = vpop.f32.mrb[0].mxu0
        %1737 = vmatprep.mubr.bf16.mxu0 %v1540
        %1738 = vmatmul.mubr.bf16.gmra.mrb[0].mxu0 %v1539
        %v1739 = vpop.f32.mrb[0].mxu0
        %v1740 = vadd.f32 %v1439, %v1739
        %v1741 = vpop.f32.mrb[0].mxu0
        %v1742 = vpop.f32.mrb[0].mxu0
        %v1743 = vadd.f32 %v1439, %v1742
        %v1744 = vpop.f32.mrb[0].mxu0
        %1745 = vmatprep.mubr.bf16.mxu0 %v1542
        %1746 = vmatmul.mubr.bf16.gmra.mrb[0].mxu0 %v1541
        %v1747 = vpop.f32.mrb[0].mxu0
        %v1748 = vadd.f32 %v1439, %v1747
        %v1749 = vpop.f32.mrb[0].mxu0
        %v1750 = vpop.f32.mrb[0].mxu0
        %v1751 = vadd.f32 %v1439, %v1750
        %v1752 = vpop.f32.mrb[0].mxu0
        %1753 = vmatprep.mubr.bf16.mxu0 %v1544
        %1754 = vmatmul.mubr.bf16.gmra.mrb[0].mxu0 %v1543
        %v1755 = vpop.f32.mrb[0].mxu0
        %v1756 = vadd.f32 %v1439, %v1755
        %v1757 = vpop.f32.mrb[0].mxu0
        %v1758 = vpop.f32.mrb[0].mxu0
        %v1759 = vadd.f32 %v1439, %v1758
        %v1760 = vpop.f32.mrb[0].mxu0
        %1761 = vmatprep.mubr.bf16.mxu0 %v1546
        %1762 = vmatmul.mubr.bf16.gmra.mrb[0].mxu0 %v1545
        %v1763 = vpop.f32.mrb[0].mxu0
        %v1764 = vadd.f32 %v1439, %v1763
        %v1765 = vpop.f32.mrb[0].mxu0
        %v1766 = vpop.f32.mrb[0].mxu0
        %v1767 = vadd.f32 %v1439, %v1766
        %v1768 = vpop.f32.mrb[0].mxu0
        %1769 = vmatprep.mubr.bf16.mxu0 %v1548
        %1770 = vmatmul.mubr.bf16.gmra.mrb[0].mxu0 %v1547
        %v1771 = vpop.f32.mrb[0].mxu0
        %v1772 = vadd.f32 %v1439, %v1771
        %v1773 = vpop.f32.mrb[0].mxu0
        %v1774 = vpop.f32.mrb[0].mxu0
        %v1775 = vadd.f32 %v1439, %v1774
        %v1776 = vpop.f32.mrb[0].mxu0
        %1777 = vmatprep.mubr.bf16.mxu0 %v1550
        %1778 = vmatmul.mubr.bf16.gmra.mrb[0].mxu0 %v1549
        %v1779 = vpop.f32.mrb[0].mxu0
        %v1780 = vadd.f32 %v1439, %v1779
        %v1781 = vpop.f32.mrb[0].mxu0
        %v1782 = vpop.f32.mrb[0].mxu0
        %v1783 = vadd.f32 %v1439, %v1782
        %v1784 = vpop.f32.mrb[0].mxu0
        %1785 = vmatprep.mubr.bf16.mxu0 %v1552
        %1786 = vmatmul.mubr.bf16.gmra.mrb[0].mxu0 %v1551
        %v1787 = vpop.f32.mrb[0].mxu0
        %v1788 = vadd.f32 %v1439, %v1787
        %v1789 = vpop.f32.mrb[0].mxu0
        %v1790 = vpop.f32.mrb[0].mxu0
        %v1791 = vadd.f32 %v1439, %v1790
        %v1792 = vpop.f32.mrb[0].mxu0
        %1793 = vmatprep.mubr.bf16.mxu0 %v1554
        %1794 = vmatmul.mubr.bf16.gmra.mrb[0].mxu0 %v1553
        %v1795 = vpop.f32.mrb[0].mxu0
        %v1796 = vadd.f32 %v1439, %v1795
        %v1797 = vpop.f32.mrb[0].mxu0
        %v1798 = vpop.f32.mrb[0].mxu0
        %v1799 = vadd.f32 %v1439, %v1798
        %v1800 = vpop.f32.mrb[0].mxu0
        %1801 = vmatprep.mubr.bf16.mxu0 %v1556
        %1802 = vmatmul.mubr.bf16.gmra.mrb[0].mxu0 %v1555
        %v1803 = vpop.f32.mrb[0].mxu0
        %v1804 = vadd.f32 %v1439, %v1803
        %v1805 = vpop.f32.mrb[0].mxu0
        %v1806 = vpop.f32.mrb[0].mxu0
        %v1807 = vadd.f32 %v1439, %v1806
        %v1808 = vpop.f32.mrb[0].mxu0
        %1809 = vmatprep.mubr.bf16.mxu0 %v1558
        %1810 = vmatmul.mubr.bf16.gmra.mrb[0].mxu0 %v1557
        %v1811 = vpop.f32.mrb[0].mxu0
        %v1812 = vadd.f32 %v1439, %v1811
        %v1813 = vpop.f32.mrb[0].mxu0
        %v1814 = vpop.f32.mrb[0].mxu0
        %v1815 = vadd.f32 %v1439, %v1814
        %v1816 = vpop.f32.mrb[0].mxu0
        %1817 = vmatprep.mubr.bf16.mxu0 %v1560
        %1818 = vmatmul.mubr.bf16.gmra.mrb[0].mxu0 %v1559
        %v1819 = vpop.f32.mrb[0].mxu0
        %v1820 = vadd.f32 %v1439, %v1819
        %v1821 = vpop.f32.mrb[0].mxu0
        %v1822 = vpop.f32.mrb[0].mxu0
        %v1823 = vadd.f32 %v1439, %v1822
        %v1824 = vpop.f32.mrb[0].mxu0
        %1825 = vmatprep.mubr.bf16.mxu0 %v1562
        %1826 = vmatmul.mubr.bf16.gmra.mrb[0].mxu0 %v1561
        %v1827 = vpop.f32.mrb[0].mxu0
        %v1828 = vadd.f32 %v1439, %v1827
        %v1829 = vpop.f32.mrb[0].mxu0
        %v1830 = vpop.f32.mrb[0].mxu0
        %v1831 = vadd.f32 %v1439, %v1830
        %v1832 = vpop.f32.mrb[0].mxu0
        %1833 = vmatprep.mubr.bf16.mxu0 %v1564
        %1834 = vmatmul.mubr.bf16.gmra.mrb[0].mxu0 %v1563
        %v1835 = vpop.f32.mrb[0].mxu0
        %v1836 = vadd.f32 %v1439, %v1835
        %v1837 = vpop.f32.mrb[0].mxu0
        %v1838 = vpop.f32.mrb[0].mxu0
        %v1839 = vadd.f32 %v1439, %v1838
        %v1840 = vpop.f32.mrb[0].mxu0
        %1841 = vmatprep.mubr.bf16.mxu0 %v1566
        %1842 = vmatmul.mubr.bf16.gmra.mrb[0].mxu0 %v1565
        %v1843 = vpop.f32.mrb[0].mxu0
        %v1844 = vadd.f32 %v1439, %v1843
        %v1845 = vpop.f32.mrb[0].mxu0
        %v1846 = vpop.f32.mrb[0].mxu0
        %v1847 = vadd.f32 %v1439, %v1846
        %v1848 = vpop.f32.mrb[0].mxu0
        %1849 = vmatprep.mubr.bf16.mxu0 %v1568
        %1850 = vmatmul.mubr.bf16.gmra.mrb[0].mxu0 %v1567
        %v1851 = vpop.f32.mrb[0].mxu0
        %v1852 = vadd.f32 %v1439, %v1851
        %v1853 = vpop.f32.mrb[0].mxu0
        %v1854 = vpop.f32.mrb[0].mxu0
        %v1855 = vadd.f32 %v1439, %v1854
        %v1856 = vpop.f32.mrb[0].mxu0
        %1857 = vdwg.mxu0
        %v1858 = vpack.c.bf16 %v1339, %v1338
        %v1859 = vpack.c.bf16 %v1341, %v1340
        %v1860 = vpack.c.bf16 %v1343, %v1342
        %v1861 = vpack.c.bf16 %v1345, %v1344
        %v1862 = vpack.c.bf16 %v1347, %v1346
        %v1863 = vpack.c.bf16 %v1349, %v1348
        %v1864 = vpack.c.bf16 %v1351, %v1350
        %v1865 = vpack.c.bf16 %v1353, %v1352
        %v1866 = vpack.c.bf16 %v1355, %v1354
        %v1867 = vpack.c.bf16 %v1357, %v1356
        %v1868 = vpack.c.bf16 %v1359, %v1358
        %v1869 = vpack.c.bf16 %v1361, %v1360
        %v1870 = vpack.c.bf16 %v1363, %v1362
        %v1871 = vpack.c.bf16 %v1365, %v1364
        %v1872 = vpack.c.bf16 %v1367, %v1366
        %v1873 = vpack.c.bf16 %v1369, %v1368
        %v1890 = vunpack.c.l.b16 %v1858
        %v1891 = vunpack.c.h.b16 %v1858
        %v1892 = vunpack.c.l.b16 %v1859
        %v1893 = vunpack.c.h.b16 %v1859
        %v1894 = vunpack.c.l.b16 %v1860
        %v1895 = vunpack.c.h.b16 %v1860
        %v1896 = vunpack.c.l.b16 %v1861
        %v1897 = vunpack.c.h.b16 %v1861
        %v1898 = vunpack.c.l.b16 %v1862
        %v1899 = vunpack.c.h.b16 %v1862
        %v1900 = vunpack.c.l.b16 %v1863
        %v1901 = vunpack.c.h.b16 %v1863
        %v1902 = vunpack.c.l.b16 %v1864
        %v1903 = vunpack.c.h.b16 %v1864
        %v1904 = vunpack.c.l.b16 %v1865
        %v1905 = vunpack.c.h.b16 %v1865
        %v1906 = vunpack.c.l.b16 %v1866
        %v1907 = vunpack.c.h.b16 %v1866
        %v1908 = vunpack.c.l.b16 %v1867
        %v1909 = vunpack.c.h.b16 %v1867
        %v1910 = vunpack.c.l.b16 %v1868
        %v1911 = vunpack.c.h.b16 %v1868
        %v1912 = vunpack.c.l.b16 %v1869
        %v1913 = vunpack.c.h.b16 %v1869
        %v1914 = vunpack.c.l.b16 %v1870
        %v1915 = vunpack.c.h.b16 %v1870
        %v1916 = vunpack.c.l.b16 %v1871
        %v1917 = vunpack.c.h.b16 %v1871
        %v1918 = vunpack.c.l.b16 %v1872
        %v1919 = vunpack.c.h.b16 %v1872
        %v1920 = vunpack.c.l.b16 %v1873
        %v1921 = vunpack.c.h.b16 %v1873
        %v1922 = vpack.c.b16 %v1890, %v1890
        %v1923 = vpack.c.b16 %v1891, %v1891
        %v1924 = vpack.c.b16 %v1892, %v1892
        %v1925 = vpack.c.b16 %v1893, %v1893
        %v1926 = vpack.c.b16 %v1894, %v1894
        %v1927 = vpack.c.b16 %v1895, %v1895
        %v1928 = vpack.c.b16 %v1896, %v1896
        %v1929 = vpack.c.b16 %v1897, %v1897
        %v1930 = vpack.c.b16 %v1898, %v1898
        %v1931 = vpack.c.b16 %v1899, %v1899
        %v1932 = vpack.c.b16 %v1900, %v1900
        %v1933 = vpack.c.b16 %v1901, %v1901
        %v1934 = vpack.c.b16 %v1902, %v1902
        %v1935 = vpack.c.b16 %v1903, %v1903
        %v1936 = vpack.c.b16 %v1904, %v1904
        %v1937 = vpack.c.b16 %v1905, %v1905
        %v1938 = vpack.c.b16 %v1906, %v1906
        %v1939 = vpack.c.b16 %v1907, %v1907
        %v1940 = vpack.c.b16 %v1908, %v1908
        %v1941 = vpack.c.b16 %v1909, %v1909
        %v1942 = vpack.c.b16 %v1910, %v1910
        %v1943 = vpack.c.b16 %v1911, %v1911
        %v1944 = vpack.c.b16 %v1912, %v1912
        %v1945 = vpack.c.b16 %v1913, %v1913
        %v1946 = vpack.c.b16 %v1914, %v1914
        %v1947 = vpack.c.b16 %v1915, %v1915
        %v1948 = vpack.c.b16 %v1916, %v1916
        %v1949 = vpack.c.b16 %v1917, %v1917
        %v1950 = vpack.c.b16 %v1918, %v1918
        %v1951 = vpack.c.b16 %v1919, %v1919
        %v1952 = vpack.c.b16 %v1920, %v1920
        %v1953 = vpack.c.b16 %v1921, %v1921
        %1986 = vst [vmem:[%s573] sm:$0xf] %v1922
        %1987 = vst [vmem:[%s573 + $0x4] sm:$0xf] %v1923
        %1988 = vst [vmem:[%s573 + $0x8] sm:$0xf] %v1924
        %1989 = vst [vmem:[%s573 + $0xc] sm:$0xf] %v1925
        %1990 = vst [vmem:[%s573 + $0x10] sm:$0xf] %v1926
        %1991 = vst [vmem:[%s573 + $0x14] sm:$0xf] %v1927
        %1992 = vst [vmem:[%s573 + $0x18] sm:$0xf] %v1928
        %1993 = vst [vmem:[%s573 + $0x1c] sm:$0xf] %v1929
        %1994 = vst [vmem:[%s573 + $0x20] sm:$0xf] %v1930
        %1995 = vst [vmem:[%s573 + $0x24] sm:$0xf] %v1931
        %1996 = vst [vmem:[%s573 + $0x28] sm:$0xf] %v1932
        %1997 = vst [vmem:[%s573 + $0x2c] sm:$0xf] %v1933
        %1998 = vst [vmem:[%s573 + $0x30] sm:$0xf] %v1934
        %1999 = vst [vmem:[%s573 + $0x34] sm:$0xf] %v1935
        %2000 = vst [vmem:[%s573 + $0x38] sm:$0xf] %v1936
        %2001 = vst [vmem:[%s573 + $0x3c] sm:$0xf] %v1937
        %2002 = vst [vmem:[%s573 + $0x40] sm:$0xf] %v1938
        %2003 = vst [vmem:[%s573 + $0x44] sm:$0xf] %v1939
        %2004 = vst [vmem:[%s573 + $0x48] sm:$0xf] %v1940
        %2005 = vst [vmem:[%s573 + $0x4c] sm:$0xf] %v1941
        %2006 = vst [vmem:[%s573 + $0x50] sm:$0xf] %v1942
        %2007 = vst [vmem:[%s573 + $0x54] sm:$0xf] %v1943
        %2008 = vst [vmem:[%s573 + $0x58] sm:$0xf] %v1944
        %2009 = vst [vmem:[%s573 + $0x5c] sm:$0xf] %v1945
        %2010 = vst [vmem:[%s573 + $0x60] sm:$0xf] %v1946
        %2011 = vst [vmem:[%s573 + $0x64] sm:$0xf] %v1947
        %2012 = vst [vmem:[%s573 + $0x68] sm:$0xf] %v1948
        %2013 = vst [vmem:[%s573 + $0x6c] sm:$0xf] %v1949
        %2014 = vst [vmem:[%s573 + $0x70] sm:$0xf] %v1950
        %2015 = vst [vmem:[%s573 + $0x74] sm:$0xf] %v1951
        %2016 = vst [vmem:[%s573 + $0x78] sm:$0xf] %v1952
        %2017 = vst [vmem:[%s573 + $0x7c] sm:$0xf] %v1953
        %v2018 = vpack.c.bf16 %v1735, %v1732
        %v2019 = vpack.c.bf16 %v1743, %v1740
        %v2020 = vpack.c.bf16 %v1751, %v1748
        %v2021 = vpack.c.bf16 %v1759, %v1756
        %v2022 = vpack.c.bf16 %v1767, %v1764
        %v2023 = vpack.c.bf16 %v1775, %v1772
        %v2024 = vpack.c.bf16 %v1783, %v1780
        %v2025 = vpack.c.bf16 %v1791, %v1788
        %v2026 = vpack.c.bf16 %v1799, %v1796
        %v2027 = vpack.c.bf16 %v1807, %v1804
        %v2028 = vpack.c.bf16 %v1815, %v1812
        %v2029 = vpack.c.bf16 %v1823, %v1820
        %v2030 = vpack.c.bf16 %v1831, %v1828
        %v2031 = vpack.c.bf16 %v1839, %v1836
        %v2032 = vpack.c.bf16 %v1847, %v1844
        %v2033 = vpack.c.bf16 %v1855, %v1852
        %v2050 = vunpack.c.l.b16 %v2018
        %v2051 = vunpack.c.h.b16 %v2018
        %v2052 = vunpack.c.l.b16 %v2019
        %v2053 = vunpack.c.h.b16 %v2019
        %v2054 = vunpack.c.l.b16 %v2020
        %v2055 = vunpack.c.h.b16 %v2020
        %v2056 = vunpack.c.l.b16 %v2021
        %v2057 = vunpack.c.h.b16 %v2021
        %v2058 = vunpack.c.l.b16 %v2022
        %v2059 = vunpack.c.h.b16 %v2022
        %v2060 = vunpack.c.l.b16 %v2023
        %v2061 = vunpack.c.h.b16 %v2023
        %v2062 = vunpack.c.l.b16 %v2024
        %v2063 = vunpack.c.h.b16 %v2024
        %v2064 = vunpack.c.l.b16 %v2025
        %v2065 = vunpack.c.h.b16 %v2025
        %v2066 = vunpack.c.l.b16 %v2026
        %v2067 = vunpack.c.h.b16 %v2026
        %v2068 = vunpack.c.l.b16 %v2027
        %v2069 = vunpack.c.h.b16 %v2027
        %v2070 = vunpack.c.l.b16 %v2028
        %v2071 = vunpack.c.h.b16 %v2028
        %v2072 = vunpack.c.l.b16 %v2029
        %v2073 = vunpack.c.h.b16 %v2029
        %v2074 = vunpack.c.l.b16 %v2030
        %v2075 = vunpack.c.h.b16 %v2030
        %v2076 = vunpack.c.l.b16 %v2031
        %v2077 = vunpack.c.h.b16 %v2031
        %v2078 = vunpack.c.l.b16 %v2032
        %v2079 = vunpack.c.h.b16 %v2032
        %v2080 = vunpack.c.l.b16 %v2033
        %v2081 = vunpack.c.h.b16 %v2033
        %v2082 = vpack.c.b16 %v2050, %v2050
        %v2083 = vpack.c.b16 %v2051, %v2051
        %v2084 = vpack.c.b16 %v2052, %v2052
        %v2085 = vpack.c.b16 %v2053, %v2053
        %v2086 = vpack.c.b16 %v2054, %v2054
        %v2087 = vpack.c.b16 %v2055, %v2055
        %v2088 = vpack.c.b16 %v2056, %v2056
        %v2089 = vpack.c.b16 %v2057, %v2057
        %v2090 = vpack.c.b16 %v2058, %v2058
        %v2091 = vpack.c.b16 %v2059, %v2059
        %v2092 = vpack.c.b16 %v2060, %v2060
        %v2093 = vpack.c.b16 %v2061, %v2061
        %v2094 = vpack.c.b16 %v2062, %v2062
        %v2095 = vpack.c.b16 %v2063, %v2063
        %v2096 = vpack.c.b16 %v2064, %v2064
        %v2097 = vpack.c.b16 %v2065, %v2065
        %v2098 = vpack.c.b16 %v2066, %v2066
        %v2099 = vpack.c.b16 %v2067, %v2067
        %v2100 = vpack.c.b16 %v2068, %v2068
        %v2101 = vpack.c.b16 %v2069, %v2069
        %v2102 = vpack.c.b16 %v2070, %v2070
        %v2103 = vpack.c.b16 %v2071, %v2071
        %v2104 = vpack.c.b16 %v2072, %v2072
        %v2105 = vpack.c.b16 %v2073, %v2073
        %v2106 = vpack.c.b16 %v2074, %v2074
        %v2107 = vpack.c.b16 %v2075, %v2075
        %v2108 = vpack.c.b16 %v2076, %v2076
        %v2109 = vpack.c.b16 %v2077, %v2077
        %v2110 = vpack.c.b16 %v2078, %v2078
        %v2111 = vpack.c.b16 %v2079, %v2079
        %v2112 = vpack.c.b16 %v2080, %v2080
        %v2113 = vpack.c.b16 %v2081, %v2081
        %2146 = vst [vmem:[%s580] sm:$0xf] %v2082
        %2147 = vst [vmem:[%s580 + $0x4] sm:$0xf] %v2083
        %2148 = vst [vmem:[%s580 + $0x8] sm:$0xf] %v2084
        %2149 = vst [vmem:[%s580 + $0xc] sm:$0xf] %v2085
        %2150 = vst [vmem:[%s580 + $0x10] sm:$0xf] %v2086
        %2151 = vst [vmem:[%s580 + $0x14] sm:$0xf] %v2087
        %2152 = vst [vmem:[%s580 + $0x18] sm:$0xf] %v2088
        %2153 = vst [vmem:[%s580 + $0x1c] sm:$0xf] %v2089
        %2154 = vst [vmem:[%s580 + $0x20] sm:$0xf] %v2090
        %2155 = vst [vmem:[%s580 + $0x24] sm:$0xf] %v2091
        %2156 = vst [vmem:[%s580 + $0x28] sm:$0xf] %v2092
        %2157 = vst [vmem:[%s580 + $0x2c] sm:$0xf] %v2093
        %2158 = vst [vmem:[%s580 + $0x30] sm:$0xf] %v2094
        %2159 = vst [vmem:[%s580 + $0x34] sm:$0xf] %v2095
        %2160 = vst [vmem:[%s580 + $0x38] sm:$0xf] %v2096
        %2161 = vst [vmem:[%s580 + $0x3c] sm:$0xf] %v2097
        %2162 = vst [vmem:[%s580 + $0x40] sm:$0xf] %v2098
        %2163 = vst [vmem:[%s580 + $0x44] sm:$0xf] %v2099
        %2164 = vst [vmem:[%s580 + $0x48] sm:$0xf] %v2100
        %2165 = vst [vmem:[%s580 + $0x4c] sm:$0xf] %v2101
        %2166 = vst [vmem:[%s580 + $0x50] sm:$0xf] %v2102
        %2167 = vst [vmem:[%s580 + $0x54] sm:$0xf] %v2103
        %2168 = vst [vmem:[%s580 + $0x58] sm:$0xf] %v2104
        %2169 = vst [vmem:[%s580 + $0x5c] sm:$0xf] %v2105
        %2170 = vst [vmem:[%s580 + $0x60] sm:$0xf] %v2106
        %2171 = vst [vmem:[%s580 + $0x64] sm:$0xf] %v2107
        %2172 = vst [vmem:[%s580 + $0x68] sm:$0xf] %v2108
        %2173 = vst [vmem:[%s580 + $0x6c] sm:$0xf] %v2109
        %2174 = vst [vmem:[%s580 + $0x70] sm:$0xf] %v2110
        %2175 = vst [vmem:[%s580 + $0x74] sm:$0xf] %v2111
        %2176 = vst [vmem:[%s580 + $0x78] sm:$0xf] %v2112
        %2177 = vst [vmem:[%s580 + $0x7c] sm:$0xf] %v2113
        %s2178 = sand.u32 %s280, 1
        %s2179 = scalar_lea.sflag [#allocation4], %s2178
        %s2180 = sand.u32 %s280, 1
        %s2181 = smul.addr %s2180, 128
        %s2182 = scalar_lea.vmem [#allocation13], %s2181
        %s2183 = sand.u32 %s310, 1
        %s2184 = scalar_lea.sflag [#allocation15], %s2183
        %s2185 = sand.u32 %s310, 1
        %s2186 = smul.addr %s2185, 128
        %s2187 = scalar_lea.vmem [#allocation14], %s2186
        // Predicated region
        $region77: #{tpu_custom_call.1} parent=51 // pred_check
          %p2188 = pneg %p290
        $region78: #{tpu_custom_call.1} parent=51 // pred_check_branch
          %2190 = sbr.rel (%p2188) target = $region80
        $region79: #{tpu_custom_call.1} parent=51 // pred_region
          %s2191 = smul.u32 32, %s43
          %s2193 = ssub.s32 2048, 2048
          %2194 = vsyncadd %s2179, %s2193
          %s2195 = smul.addr %s44, 32
          %s2196 = sadd.s32 %s2191, %s2195
          %s2197 = smul.addr %s42, 64
          %s2198 = sadd.s32 %s2196, %s2197
          %s2199 = smul.addr %s2198, 64
          %s2200 = scalar_lea.hbm %s8, %s2199
          %s2201 = sshll.u32 %s2182, 4
          %s2202 = int_to_ptr.vmem [resolvable:$true] %s2201
          %2207 = dma.vmem_to_hbm [thread:$0]  %s2202, 2048, %s2200, %s2179, 64, 64, 4
        $region80: #{tpu_custom_call.1} parent=51 // pred_fallthru
          _
        // Predicated region
        $region81: #{tpu_custom_call.1} parent=51 // pred_check
          %p2208 = pneg %p320
        $region82: #{tpu_custom_call.1} parent=51 // pred_check_branch
          %2210 = sbr.rel (%p2208) target = $region84
        $region83: #{tpu_custom_call.1} parent=51 // pred_region
          %s2211 = smul.u32 32, %s43
          %s2213 = ssub.s32 2048, 2048
          %2214 = vsyncadd %s2184, %s2213
          %s2215 = smul.addr %s44, 32
          %s2216 = sadd.s32 %s2211, %s2215
          %s2217 = smul.addr %s42, 64
          %s2218 = sadd.s32 %s2216, %s2217
          %s2219 = smul.addr %s2218, 64
          %s2220 = scalar_lea.hbm %s9, %s2219
          %s2221 = sshll.u32 %s2187, 4
          %s2222 = int_to_ptr.vmem [resolvable:$true] %s2221
          %2227 = dma.vmem_to_hbm [thread:$0]  %s2222, 2048, %s2220, %s2184, 64, 64, 4
        $region84: #{tpu_custom_call.1} parent=51 // pred_fallthru
          _
      $region52: #{tpu_custom_call.1} parent=5 // pred_fallthru
        _
      %p2228 = scmp.le.s32.totalorder 2, %s32
      // Predicated region
      $region85: #{tpu_custom_call.1} parent=5 // pred_check
        %p2229 = pneg %p2228
      $region86: #{tpu_custom_call.1} parent=5 // pred_check_branch
        %2231 = sbr.rel (%p2229) target = $region88
      $region87: #{tpu_custom_call.1} parent=5 // pred_region
        %s2232 = ssub.s32 %s32, 2
        // Predicated region
        $region89: #{tpu_custom_call.1} parent=87 // pred_check
          %p2233 = pneg %p296
        $region90: #{tpu_custom_call.1} parent=87 // pred_check_branch
          %2235 = sbr.rel (%p2233) target = $region92
        $region91: #{tpu_custom_call.1} parent=87 // pred_region
          %s2236 = sand.u32 %s281, 1
          %s2237 = scalar_lea.sflag [#allocation4], %s2236
          %s2238 = sand.u32 %s281, 1
          %s2239 = smul.addr %s2238, 128
          %s2240 = scalar_lea.vmem [#allocation13], %s2239
          %2241 = dma.done %s2237, 2048
        $region92: #{tpu_custom_call.1} parent=87 // pred_fallthru
          _
        // Predicated region
        $region93: #{tpu_custom_call.1} parent=87 // pred_check
          %p2242 = pneg %p326
        $region94: #{tpu_custom_call.1} parent=87 // pred_check_branch
          %2244 = sbr.rel (%p2242) target = $region96
        $region95: #{tpu_custom_call.1} parent=87 // pred_region
          %s2245 = sand.u32 %s311, 1
          %s2246 = scalar_lea.sflag [#allocation15], %s2245
          %s2247 = sand.u32 %s311, 1
          %s2248 = smul.addr %s2247, 128
          %s2249 = scalar_lea.vmem [#allocation14], %s2248
          %2250 = dma.done %s2246, 2048
        $region96: #{tpu_custom_call.1} parent=87 // pred_fallthru
          _
      $region88: #{tpu_custom_call.1} parent=5 // pred_fallthru
        _
    $region6: #{tpu_custom_call.1} parent=1 // loop_footer
      %s36 = sadd.s32 1, %s32
    $region7: #{tpu_custom_call.1} parent=1 // loop_footer_branch
      %31 = sbr.rel target = $region3
    $region8: #{tpu_custom_call.1} parent=1 // loop_exit
      _
    %2251 = vsyncpa [#allocation3], 1
    %s2252 = scalar_lea.sflag [#allocation3], 1
    %2253 = vsyncpa %s2252, 1
    %2254 = vsyncpa [#allocation6], 1
    %s2255 = scalar_lea.sflag [#allocation6], 1
    %2256 = vsyncpa %s2255, 1
    %2257 = vsyncpa [#allocation9], 1
    %s2258 = scalar_lea.sflag [#allocation9], 1
    %2259 = vsyncpa %s2258, 1
    %2260 = vsyncpa [#allocation12], 1
    %2261 = vsyncpa [#allocation4], 1
    %s2262 = scalar_lea.sflag [#allocation4], 1
    %2263 = vsyncpa %s2262, 1
    %2264 = vsyncpa [#allocation15], 1
    %s2265 = scalar_lea.sflag [#allocation15], 1
    %2266 = vsyncpa %s2265, 1

</llo_original>
